<compile_context>
chip_gen: v7x
topology: tpu7x:2x2x1
jax: 0.10.0
libtpu: 0.0.40
codegen_flags: <defaults>
</compile_context>

<pallas_src>
import jax
import jax.numpy as jnp
from jax.experimental import pallas as pl
from jax.experimental.pallas import tpu as pltpu

BN_EPS = 1e-5
ALPHA = 0.5            # GraphConvolution.alpha (fixed by the module)
LANE = 128
DEFAULT_ROW_TILE = 256


# ----------------------------------------------------------------------------
# helpers
# ----------------------------------------------------------------------------
def _round_up(n, m):
    return ((n + m - 1) // m) * m


def _pad2(a, rows, cols):
    pr, pc = rows - a.shape[0], cols - a.shape[1]
    if pr or pc:
        a = jnp.pad(a, ((0, pr), (0, pc)))
    return a


def _fold_layer(p, *, pre_scale=1.0):
    """Fold eval-mode BatchNorm (and an optional constant pre-scale such as the
    alpha=0.5 support-mixing factor) into the weight columns plus a bias."""
    scale = p["gamma"] / jnp.sqrt(p["var"] + BN_EPS)        # (1, fo)
    bias = p["beta"] - p["mean"] * scale                    # (1, fo)
    w = p["w"] * (scale * pre_scale)                        # (fi, fo)
    return w, bias


def _choose_row_tile(n, requested):
    """Row tile: multiple of 16 (bf16 packing), >=2 grid steps when N allows
    (v7x megacore), and <=~12.5% row-padding waste for ragged N."""
    cap = max(16, requested)
    if n > 16:
        cap = min(cap, _round_up((n + 1) // 2, 16))   # guarantee >= 2 grid steps
    tile = min(cap, _round_up(n, 16))
    tile = _round_up(tile, 16)
    while tile > 16 and (_round_up(n, tile) - n) * 8 > n:
        tile = _round_up(tile // 2, 16)
    return tile


def _vmem_limit_bytes():
    """~75% of physical VMEM: ~96 MiB on v5e/v6e (128 MiB), ~48 MiB on v7x."""
    cap = 0
    try:
        info = pltpu.get_tpu_info()
        cap = int(getattr(info, "vmem_capacity_bytes", 0) or 0)
    except Exception:
        cap = 0
    if cap < 32 * 1024 * 1024:
        cap = 64 * 1024 * 1024                      # conservative (v7x-sized)
    return (cap // 4) * 3


def _default_elementwise_dtype():
    """bf16 VALU exists on v6e / v7x; v5e and older keep elementwise math f32."""
    try:
        kind = jax.devices()[0].device_kind.lower()
    except Exception:
        return jnp.float32
    if any(old in kind for old in ("v2", "v3", "v4", "v5")):
        return jnp.float32
    return jnp.bfloat16


# ----------------------------------------------------------------------------
# fused kernel: layer0 -> n_mid x GraphConvolution -> last layer
# ----------------------------------------------------------------------------
def _make_kernel(n_mid, res0, res_last, mm_dtype, ew_dtype):
    def compute(x_ref, w0_ref, b0_ref, wm_ref, bm_ref, wl_ref, bl_ref,
                a_ref, o_ref):
        a = a_ref[0, 0].astype(ew_dtype)              # PReLU slope (SMEM scalar)
        x = x_ref[...]

        # ---- layer 0: Dense(in, hidden); BN scale pre-folded into w0 --------
        y = jnp.dot(x.astype(mm_dtype), w0_ref[...],
                    preferred_element_type=jnp.float32)
        y = y + b0_ref[...]
        if res0:                                      # in_feats == hidden
            y = y + x.astype(jnp.float32)
        act = y.astype(ew_dtype)
        h0 = act

        # ---- middle: GraphConvolution(hidden, hidden) ------------------------
        # support = 0.5*z + 0.5*h0; the 0.5 and BN scale are folded into wm, so
        # per-layer elementwise work is PReLU + two adds (dropout = id in eval).
        for l in range(n_mid):                        # static unroll over depth
            z = jnp.where(act >= 0, act, a * act)
            y = jnp.dot((z + h0).astype(mm_dtype), wm_ref[l],
                        preferred_element_type=jnp.float32)
            y = y + bm_ref[l] + z.astype(jnp.float32)  # bias + residual
            act = y.astype(ew_dtype)

        # ---- last layer: Dense(hidden, out_feats) ----------------------------
        z = jnp.where(act >= 0, act, a * act)
        y = jnp.dot(z.astype(mm_dtype), wl_ref[...],
                    preferred_element_type=jnp.float32)
        y = y + bl_ref[...]
        if res_last:                                  # hidden == out_feats
            y = y + z.astype(jnp.float32)
        o_ref[...] = y.astype(o_ref.dtype)

    if n_mid > 0:
        def kernel(x_ref, w0_ref, b0_ref, wm_ref, bm_ref, wl_ref, bl_ref,
                   a_ref, o_ref):
            compute(x_ref, w0_ref, b0_ref, wm_ref, bm_ref, wl_ref, bl_ref,
                    a_ref, o_ref)
    else:
        def kernel(x_ref, w0_ref, b0_ref, wl_ref, bl_ref, a_ref, o_ref):
            compute(x_ref, w0_ref, b0_ref, None, None, wl_ref, bl_ref,
                    a_ref, o_ref)
    return kernel


# ----------------------------------------------------------------------------
# wrapper
# ----------------------------------------------------------------------------
def feed_forward_net_ii(x, params, prelu_a, *, in_feats, hidden, out_feats,
                        n_layers, row_tile=DEFAULT_ROW_TILE,
                        matmul_dtype=jnp.bfloat16, elementwise_dtype=None,
                        out_dtype=jnp.float32):
    assert n_layers >= 2, "n_layers == 1 path not implemented"
    # TODO(synk): n_layers == 1 path (single bias-free nn.Linear).
    n = x.shape[0]
    n_mid = n_layers - 2
    ew_dtype = elementwise_dtype or _default_elementwise_dtype()

    in_p = _round_up(in_feats, LANE)
    hid_p = _round_up(hidden, LANE)
    out_p = _round_up(out_feats, LANE)

    row_tile = _choose_row_tile(n, row_tile)
    n_p = _round_up(n, row_tile)

    res0 = (in_feats == hidden)
    res_last = (hidden == out_feats)

    # x is only a matmul operand unless the layer-0 residual is taken.
    x_dtype = ew_dtype if res0 else matmul_dtype
    x_p = _pad2(x, n_p, in_p).astype(x_dtype)

    # layer 0 (Dense in->hidden): BN scale folded into the weight columns
    w0, b0 = _fold_layer(params[0])
    w0_p = _pad2(w0, in_p, hid_p).astype(matmul_dtype)
    b0_p = _pad2(b0, 1, hid_p)

    # middle layers: fold BN scale AND the alpha=0.5 support-mixing factor
    if n_mid > 0:
        wm_l, bm_l = [], []
        for lid in range(1, n_layers - 1):
            w, b = _fold_layer(params[lid], pre_scale=ALPHA)
            wm_l.append(_pad2(w, hid_p, hid_p))
            bm_l.append(_pad2(b, 1, hid_p))
        wm_p = jnp.stack(wm_l).astype(matmul_dtype)   # (n_mid, hid_p, hid_p)
        bm_p = jnp.stack(bm_l)                        # (n_mid, 1, hid_p)

    # last layer (Dense hidden->out)
    wl, bl = _fold_layer(params[n_layers - 1])
    wl_p = _pad2(wl, hid_p, out_p).astype(matmul_dtype)
    bl_p = _pad2(bl, 1, out_p)

    a2 = jnp.asarray(prelu_a, jnp.float32).reshape(1, 1)

    kernel = _make_kernel(n_mid, res0, res_last, matmul_dtype, ew_dtype)

    # grid-invariant operands are DMA'd once -> single-buffer them.
    const2 = lambda s: pl.BlockSpec(s, lambda i: (0, 0),
                                    pipeline_mode=pl.Buffered(1))
    const3 = lambda s: pl.BlockSpec(s, lambda i: (0, 0, 0),
                                    pipeline_mode=pl.Buffered(1))

    in_specs = [pl.BlockSpec((row_tile, in_p), lambda i: (i, 0)),
                const2((in_p, hid_p)), const2((1, hid_p))]
    args = [x_p, w0_p, b0_p]
    if n_mid > 0:
        in_specs += [const3((n_mid, hid_p, hid_p)), const3((n_mid, 1, hid_p))]
        args += [wm_p, bm_p]
    in_specs += [const2((hid_p, out_p)), const2((1, out_p)),
                 pl.BlockSpec((1, 1), lambda i: (0, 0),
                              memory_space=pltpu.SMEM)]
    args += [wl_p, bl_p, a2]

    mm_bytes = jnp.dtype(matmul_dtype).itemsize
    w_elems = in_p * hid_p + n_mid * hid_p * hid_p + hid_p * out_p
    bytes_accessed = (n_p * in_p * jnp.dtype(x_dtype).itemsize
                      + w_elems * mm_bytes
                      + (hid_p + n_mid * hid_p + out_p) * 4
                      + n_p * out_p * jnp.dtype(out_dtype).itemsize)
    cost = pl.CostEstimate(flops=2 * n_p * w_elems, transcendentals=0,
                           bytes_accessed=bytes_accessed)

    out_padded = pl.pallas_call(
        kernel,
        out_shape=jax.ShapeDtypeStruct((n_p, out_p), out_dtype),
        grid=(n_p // row_tile,),
        in_specs=in_specs,
        out_specs=pl.BlockSpec((row_tile, out_p), lambda i: (i, 0)),
        compiler_params=pltpu.CompilerParams(
            dimension_semantics=("parallel",),
            vmem_limit_bytes=_vmem_limit_bytes()),
        cost_estimate=cost,
    )(*args)

    return out_padded[:n, :out_feats]


# ----------------------------------------------------------------------------
# parameter construction (matches module __init__ shapes / init ranges)
# ----------------------------------------------------------------------------
def init_params(key, in_feats, hidden, out_feats, n_layers):
    assert n_layers >= 2
    params = []

    def bn_params(key, f):
        kg, kb, km, kv = jax.random.split(key, 4)
        return dict(
            gamma=jax.random.uniform(kg, (1, f), jnp.float32, 0.5, 1.5),
            beta=jax.random.uniform(kb, (1, f), jnp.float32, -0.5, 0.5),
            mean=jax.random.uniform(km, (1, f), jnp.float32, -0.5, 0.5),
            var=jax.random.uniform(kv, (1, f), jnp.float32, 0.5, 1.5),
        )

    dims = [(in_feats, hidden)] + [(hidden, hidden)] * (n_layers - 2) \
           + [(hidden, out_feats)]
    for (fi, fo) in dims:
        key, kw, kbn = jax.random.split(key, 3)
        stdv = 1.0 / (fo ** 0.5)   # both Dense and GraphConvolution: 1/sqrt(out)
        w = jax.random.uniform(kw, (fi, fo), jnp.float32, -stdv, stdv)
        params.append(dict(w=w, **bn_params(kbn, fo)))

    prelu_a = jnp.full((1, 1), 0.25, jnp.float32)     # nn.PReLU default init
    return params, prelu_a


# ----------------------------------------------------------------------------
# references
# ----------------------------------------------------------------------------
def reference_exact(x, params, prelu_a, *, in_feats, hidden, out_feats,
                    n_layers, matmul_dtype=jnp.bfloat16, elementwise_dtype=None):
    """Pure-JAX mirror of the kernel numerics (same folding, same dtypes)."""
    ew = elementwise_dtype or _default_elementwise_dtype()
    mm = matmul_dtype
    res0 = (in_feats == hidden)
    res_last = (hidden == out_feats)
    a = jnp.asarray(prelu_a, jnp.float32).reshape(()).astype(ew)

    def dot(u, w):
        return jnp.dot(u.astype(mm), w.astype(mm),
                       preferred_element_type=jnp.float32)

    w0, b0 = _fold_layer(params[0])
    x_in = x.astype(ew if res0 else mm)
    y = dot(x_in, w0) + b0
    if res0:
        y = y + x_in.astype(jnp.float32)
    act = y.astype(ew)
    h0 = act
    for lid in range(1, n_layers - 1):
        w, b = _fold_layer(params[lid], pre_scale=ALPHA)
        z = jnp.where(act >= 0, act, a * act)
        y = dot(z + h0, w) + b + z.astype(jnp.float32)
        act = y.astype(ew)
    w, b = _fold_layer(params[n_layers - 1])
    z = jnp.where(act >= 0, act, a * act)
    y = dot(z, w) + b
    if res_last:
        y = y + z.astype(jnp.float32)
    return y


def reference_f32(x, params, prelu_a, *, in_feats, hidden, out_feats, n_layers):
    """Straight f32 transcription of the PyTorch module (eval mode)."""
    a = jnp.asarray(prelu_a, jnp.float32).reshape(())
    hp = jax.lax.Precision.HIGHEST

    def bn(y, p):
        return (y - p["mean"]) * (p["gamma"] / jnp.sqrt(p["var"] + BN_EPS)) + p["beta"]

    def prelu(v):
        return jnp.where(v >= 0, v, a * v)

    y = bn(jnp.dot(x, params[0]["w"], precision=hp), params[0])
    if in_feats == hidden:
        y = y + x
    h0, act = y, y
    for lid in range(1, n_layers - 1):
        p = params[lid]
        z = prelu(act)
        support = (1.0 - ALPHA) * z + ALPHA * h0
        act = bn(jnp.dot(support, p["w"], precision=hp), p) + z
    p = params[n_layers - 1]
    z = prelu(act)
    y = bn(jnp.dot(z, p["w"], precision=hp), p)
    if hidden == out_feats:
        y = y + z
    return y


# ----------------------------------------------------------------------------
if __name__ == "__main__":
    key = jax.random.PRNGKey(0)

    # (N, in_feats, hidden, out_feats, n_layers)
    configs = [
        (512, 128, 128, 64, 4),    # layer-0 residual on, n_mid=2, out padded
        (300, 96, 128, 128, 3),    # ragged N -> tile 160 (grid 2), last residual
        (200, 64, 128, 128, 2),    # n_mid == 0 path (middle operands dropped)
    ]

    for (N, FI, HID, FO, NL) in configs:
        key, kx, kp = jax.random.split(key, 3)
        x = jax.random.normal(kx, (N, FI), jnp.float32)
        params, prelu_a = init_params(kp, FI, HID, FO, NL)

        out = feed_forward_net_ii(x, params, prelu_a, in_feats=FI, hidden=HID,
                                  out_feats=FO, n_layers=NL)
        out = jax.block_until_ready(out)
        assert out.shape == (N, FO)

        # tight check vs a reference with identical low-precision numerics
        ref = reference_exact(x, params, prelu_a, in_feats=FI, hidden=HID,
                              out_feats=FO, n_layers=NL)
        assert jnp.allclose(out, ref, atol=2e-3, rtol=2e-3), \
            "mismatch vs exact reference"

        # coarse check vs the original f32 module semantics (guards folding)
        ref32 = reference_f32(x, params, prelu_a, in_feats=FI, hidden=HID,
                              out_feats=FO, n_layers=NL)
        assert float(jnp.max(jnp.abs(out - ref32))) < 0.25, \
            "drift vs f32 module semantics"

    print("KERNEL_OK")
</pallas_src>

<mosaic_0001>
module attributes {stable_mosaic.version = 11 : i64} {
  func.func @kernel(%arg0: i32, %arg1: memref<256x128xbf16, #tpu.memory_space<vmem>>, %arg2: memref<128x128xbf16, #tpu.memory_space<vmem>>, %arg3: memref<1x128xf32, #tpu.memory_space<vmem>>, %arg4: memref<2x128x128xbf16, #tpu.memory_space<vmem>>, %arg5: memref<2x1x128xf32, #tpu.memory_space<vmem>>, %arg6: memref<128x128xbf16, #tpu.memory_space<vmem>>, %arg7: memref<1x128xf32, #tpu.memory_space<vmem>>, %arg8: memref<1x1xf32, #tpu.memory_space<smem>>, %arg9: memref<256x128xf32, #tpu.memory_space<vmem>>) attributes {dimension_semantics = [#tpu.dimension_semantics<parallel>], iteration_bounds = array<i64: 2>, scalar_prefetch = 0 : i64, scratch_operands = 0 : i64, tpu.core_type = #tpu.core_type<tc>, window_params = [{transform_indices = @transform_0, window_bounds = array<i64: 256, 128>}, {pipeline_mode = #tpu.pipeline_mode<synchronous>, transform_indices = @transform_1, window_bounds = array<i64: 128, 128>}, {pipeline_mode = #tpu.pipeline_mode<synchronous>, transform_indices = @transform_2, window_bounds = array<i64: 1, 128>}, {pipeline_mode = #tpu.pipeline_mode<synchronous>, transform_indices = @transform_3, window_bounds = array<i64: 2, 128, 128>}, {pipeline_mode = #tpu.pipeline_mode<synchronous>, transform_indices = @transform_4, window_bounds = array<i64: 2, 1, 128>}, {pipeline_mode = #tpu.pipeline_mode<synchronous>, transform_indices = @transform_5, window_bounds = array<i64: 128, 128>}, {pipeline_mode = #tpu.pipeline_mode<synchronous>, transform_indices = @transform_6, window_bounds = array<i64: 1, 128>}, {transform_indices = @transform_7, window_bounds = array<i64: 1, 1>}, {transform_indices = @transform_8, window_bounds = array<i64: 256, 128>}]} {
    %c0 = arith.constant 0 : index
    %c0_0 = arith.constant 0 : index
    %0 = memref.load %arg8[%c0, %c0_0] : memref<1x1xf32, #tpu.memory_space<smem>>
    %1 = arith.truncf %0 : f32 to bf16
    %c0_1 = arith.constant 0 : index
    %c0_2 = arith.constant 0 : index
    %2 = vector.load %arg1[%c0_1, %c0_2] : memref<256x128xbf16, #tpu.memory_space<vmem>>, vector<256x128xbf16>
    %c0_3 = arith.constant 0 : index
    %c0_4 = arith.constant 0 : index
    %3 = vector.load %arg2[%c0_3, %c0_4] : memref<128x128xbf16, #tpu.memory_space<vmem>>, vector<128x128xbf16>
    %cst = arith.constant dense<0.000000e+00> : vector<256x128xf32>
    %4 = tpu.matmul %2, %3, %cst {dimension_numbers = #tpu.dot_dimension_numbers<[1], [0], [0], [1], [0, 0, 1, 1], [], []>} : vector<256x128xbf16>, vector<128x128xbf16>, vector<256x128xf32> -> vector<256x128xf32>
    %c0_5 = arith.constant 0 : index
    %c0_6 = arith.constant 0 : index
    %5 = vector.load %arg3[%c0_5, %c0_6] : memref<1x128xf32, #tpu.memory_space<vmem>>, vector<1x128xf32>
    %6 = vector.broadcast %5 : vector<1x128xf32> to vector<256x128xf32>
    %7 = arith.addf %4, %6 : vector<256x128xf32>
    %8 = arith.extf %2 : vector<256x128xbf16> to vector<256x128xf32>
    %9 = arith.addf %7, %8 : vector<256x128xf32>
    %10 = arith.truncf %9 : vector<256x128xf32> to vector<256x128xbf16>
    %cst_7 = arith.constant 0.000000e+00 : bf16
    %11 = vector.broadcast %cst_7 : bf16 to vector<256x128xbf16>
    %12 = arith.cmpf oge, %10, %11 : vector<256x128xbf16>
    %13 = vector.broadcast %1 : bf16 to vector<256x128xbf16>
    %14 = arith.mulf %13, %10 : vector<256x128xbf16>
    %15 = arith.select %12, %10, %14 : vector<256x128xi1>, vector<256x128xbf16>
    %16 = arith.addf %15, %10 : vector<256x128xbf16>
    %c0_8 = arith.constant 0 : index
    %c0_9 = arith.constant 0 : index
    %c0_10 = arith.constant 0 : index
    %17 = vector.load %arg4[%c0_8, %c0_9, %c0_10] : memref<2x128x128xbf16, #tpu.memory_space<vmem>>, vector<1x128x128xbf16>
    %18 = vector.shape_cast %17 : vector<1x128x128xbf16> to vector<128x128xbf16>
    %cst_11 = arith.constant dense<0.000000e+00> : vector<256x128xf32>
    %19 = tpu.matmul %16, %18, %cst_11 {dimension_numbers = #tpu.dot_dimension_numbers<[1], [0], [0], [1], [0, 0, 1, 1], [], []>} : vector<256x128xbf16>, vector<128x128xbf16>, vector<256x128xf32> -> vector<256x128xf32>
    %c0_12 = arith.constant 0 : index
    %c0_13 = arith.constant 0 : index
    %c0_14 = arith.constant 0 : index
    %20 = vector.load %arg5[%c0_12, %c0_13, %c0_14] : memref<2x1x128xf32, #tpu.memory_space<vmem>>, vector<1x1x128xf32>
    %21 = vector.shape_cast %20 : vector<1x1x128xf32> to vector<1x128xf32>
    %22 = vector.broadcast %21 : vector<1x128xf32> to vector<256x128xf32>
    %23 = arith.addf %19, %22 : vector<256x128xf32>
    %24 = arith.extf %15 : vector<256x128xbf16> to vector<256x128xf32>
    %25 = arith.addf %23, %24 : vector<256x128xf32>
    %26 = arith.truncf %25 : vector<256x128xf32> to vector<256x128xbf16>
    %cst_15 = arith.constant 0.000000e+00 : bf16
    %27 = vector.broadcast %cst_15 : bf16 to vector<256x128xbf16>
    %28 = arith.cmpf oge, %26, %27 : vector<256x128xbf16>
    %29 = vector.broadcast %1 : bf16 to vector<256x128xbf16>
    %30 = arith.mulf %29, %26 : vector<256x128xbf16>
    %31 = arith.select %28, %26, %30 : vector<256x128xi1>, vector<256x128xbf16>
    %32 = arith.addf %31, %10 : vector<256x128xbf16>
    %c1 = arith.constant 1 : index
    %c0_16 = arith.constant 0 : index
    %c0_17 = arith.constant 0 : index
    %33 = vector.load %arg4[%c1, %c0_16, %c0_17] : memref<2x128x128xbf16, #tpu.memory_space<vmem>>, vector<1x128x128xbf16>
    %34 = vector.shape_cast %33 : vector<1x128x128xbf16> to vector<128x128xbf16>
    %cst_18 = arith.constant dense<0.000000e+00> : vector<256x128xf32>
    %35 = tpu.matmul %32, %34, %cst_18 {dimension_numbers = #tpu.dot_dimension_numbers<[1], [0], [0], [1], [0, 0, 1, 1], [], []>} : vector<256x128xbf16>, vector<128x128xbf16>, vector<256x128xf32> -> vector<256x128xf32>
    %c1_19 = arith.constant 1 : index
    %c0_20 = arith.constant 0 : index
    %c0_21 = arith.constant 0 : index
    %36 = vector.load %arg5[%c1_19, %c0_20, %c0_21] : memref<2x1x128xf32, #tpu.memory_space<vmem>>, vector<1x1x128xf32>
    %37 = vector.shape_cast %36 : vector<1x1x128xf32> to vector<1x128xf32>
    %38 = vector.broadcast %37 : vector<1x128xf32> to vector<256x128xf32>
    %39 = arith.addf %35, %38 : vector<256x128xf32>
    %40 = arith.extf %31 : vector<256x128xbf16> to vector<256x128xf32>
    %41 = arith.addf %39, %40 : vector<256x128xf32>
    %42 = arith.truncf %41 : vector<256x128xf32> to vector<256x128xbf16>
    %cst_22 = arith.constant 0.000000e+00 : bf16
    %43 = vector.broadcast %cst_22 : bf16 to vector<256x128xbf16>
    %44 = arith.cmpf oge, %42, %43 : vector<256x128xbf16>
    %45 = vector.broadcast %1 : bf16 to vector<256x128xbf16>
    %46 = arith.mulf %45, %42 : vector<256x128xbf16>
    %47 = arith.select %44, %42, %46 : vector<256x128xi1>, vector<256x128xbf16>
    %c0_23 = arith.constant 0 : index
    %c0_24 = arith.constant 0 : index
    %48 = vector.load %arg6[%c0_23, %c0_24] : memref<128x128xbf16, #tpu.memory_space<vmem>>, vector<128x128xbf16>
    %cst_25 = arith.constant dense<0.000000e+00> : vector<256x128xf32>
    %49 = tpu.matmul %47, %48, %cst_25 {dimension_numbers = #tpu.dot_dimension_numbers<[1], [0], [0], [1], [0, 0, 1, 1], [], []>} : vector<256x128xbf16>, vector<128x128xbf16>, vector<256x128xf32> -> vector<256x128xf32>
    %c0_26 = arith.constant 0 : index
    %c0_27 = arith.constant 0 : index
    %50 = vector.load %arg7[%c0_26, %c0_27] : memref<1x128xf32, #tpu.memory_space<vmem>>, vector<1x128xf32>
    %51 = vector.broadcast %50 : vector<1x128xf32> to vector<256x128xf32>
    %52 = arith.addf %49, %51 : vector<256x128xf32>
    %c0_28 = arith.constant 0 : index
    %c0_29 = arith.constant 0 : index
    %53 = vector.load %arg9[%c0_28, %c0_29] : memref<256x128xf32, #tpu.memory_space<vmem>>, vector<256x128xf32>
    tpu.vector_store %arg9[%c0_28, %c0_29], %52 {strides = array<i32>} : memref<256x128xf32, #tpu.memory_space<vmem>>, vector<256x128xf32>,
    return
  }
  func.func @transform_0(%arg0: i32) -> (i32, i32) {
    %c0_i32 = arith.constant 0 : i32
    %c0_i32_0 = arith.constant 0 : i32
    return %arg0, %c0_i32 : i32, i32
  }
  func.func @transform_1(%arg0: i32) -> (i32, i32) {
    %c0_i32 = arith.constant 0 : i32
    %c0_i32_0 = arith.constant 0 : i32
    %c0_i32_1 = arith.constant 0 : i32
    return %c0_i32, %c0_i32_0 : i32, i32
  }
  func.func @transform_2(%arg0: i32) -> (i32, i32) {
    %c0_i32 = arith.constant 0 : i32
    %c0_i32_0 = arith.constant 0 : i32
    %c0_i32_1 = arith.constant 0 : i32
    return %c0_i32, %c0_i32_0 : i32, i32
  }
  func.func @transform_3(%arg0: i32) -> (i32, i32, i32) {
    %c0_i32 = arith.constant 0 : i32
    %c0_i32_0 = arith.constant 0 : i32
    %c0_i32_1 = arith.constant 0 : i32
    %c0_i32_2 = arith.constant 0 : i32
    return %c0_i32, %c0_i32_0, %c0_i32_1 : i32, i32, i32
  }
  func.func @transform_4(%arg0: i32) -> (i32, i32, i32) {
    %c0_i32 = arith.constant 0 : i32
    %c0_i32_0 = arith.constant 0 : i32
    %c0_i32_1 = arith.constant 0 : i32
    %c0_i32_2 = arith.constant 0 : i32
    return %c0_i32, %c0_i32_0, %c0_i32_1 : i32, i32, i32
  }
  func.func @transform_5(%arg0: i32) -> (i32, i32) {
    %c0_i32 = arith.constant 0 : i32
    %c0_i32_0 = arith.constant 0 : i32
    %c0_i32_1 = arith.constant 0 : i32
    return %c0_i32, %c0_i32_0 : i32, i32
  }
  func.func @transform_6(%arg0: i32) -> (i32, i32) {
    %c0_i32 = arith.constant 0 : i32
    %c0_i32_0 = arith.constant 0 : i32
    %c0_i32_1 = arith.constant 0 : i32
    return %c0_i32, %c0_i32_0 : i32, i32
  }
  func.func @transform_7(%arg0: i32) -> (i32, i32) {
    %c0_i32 = arith.constant 0 : i32
    %c0_i32_0 = arith.constant 0 : i32
    %c0_i32_1 = arith.constant 0 : i32
    return %c0_i32, %c0_i32_0 : i32, i32
  }
  func.func @transform_8(%arg0: i32) -> (i32, i32) {
    %c0_i32 = arith.constant 0 : i32
    %c0_i32_0 = arith.constant 0 : i32
    return %arg0, %c0_i32 : i32, i32
  }
}

</mosaic_0001>

<llo_original>
// kernel: tpu_custom_call.1
$region0: #{tpu_custom_call.1}
  #allocation0 [shape = 'u32[]', space=smem, size = 0x4, offset = 0x4, fixed_abs, tag = 'smem constant byte address 0x4 - core index']
  #allocation1 [shape = 'u32[144,128]{1,0:T(1,128)}', space=vmem, size = 0x12000, scoped, tag = 'internal scratch']
  #allocation2 [shape = 'f32[1,1]{1,0:T(1,128)S(6)}', space=smem, size = 0x200, scoped, tag = 'scoped memory for tpu_custom_call.1']
  %s0 = inlined_call_operand.hbm [shape: bf16[512,128], index: 0, kind: input, shape index: {}]
  %s1 = inlined_call_operand.hbm [shape: bf16[128,128], index: 1, kind: input, shape index: {}]
  %s2 = inlined_call_operand.vmem [shape: f32[1,128], index: 2, kind: input, shape index: {}]
  %s3 = inlined_call_operand.hbm [shape: bf16[2,128,128], index: 3, kind: input, shape index: {}]
  %s4 = inlined_call_operand.vmem [shape: f32[2,1,128], index: 4, kind: input, shape index: {}]
  %s5 = inlined_call_operand.hbm [shape: bf16[128,128], index: 5, kind: input, shape index: {}]
  %s6 = inlined_call_operand.vmem [shape: f32[1,128], index: 6, kind: input, shape index: {}]
  %s7 = inlined_call_operand.<no memory space> [shape: f32[1,1], index: 7, kind: input, shape index: {}]
  %s8 = inlined_call_operand.hbm [shape: f32[512,128], index: 8, kind: output, shape index: {}]
  %s9 = sld [smem:[#allocation0]]
  $region81: #{tpu_custom_call.1} parent=0
    _
  %s11 = ssub.s32 1, %s9
  %s12 = scalar_select 0, %s11, %s9
  %13 = sst [smem:[#allocation2]] %s7
  $region1: #{tpu_custom_call.1} parent=0
    #allocation3 [shape = 'u8[131072]{0}', space=vmem, size = 0x20000, scoped, tag = 'input window, operand 0']
    #allocation4 [shape = 's32[2]{0}', space=sflag, size = 0x8, scoped, tag = 'scoped memory for tpu_custom_call.1']
    #allocation5 [shape = 's32[2]{0}', space=sflag, size = 0x8, scoped, tag = 'scoped memory for tpu_custom_call.1']
    #allocation6 [shape = 'u8[32768]{0}', space=vmem, size = 0x8000, scoped, tag = 'input window, operand 1, single buffered']
    #allocation7 [shape = 's32[1]{0}', space=sflag, size = 0x4, scoped, tag = 'scoped memory for tpu_custom_call.1']
    #allocation8 [shape = 'u8[65536]{0}', space=vmem, size = 0x10000, scoped, tag = 'input window, operand 3, single buffered']
    #allocation9 [shape = 'u8[32768]{0}', space=vmem, size = 0x8000, scoped, tag = 'input window, operand 5, single buffered']
    #allocation10 [shape = 's32[1]{0}', space=sflag, size = 0x4, scoped, tag = 'scoped memory for tpu_custom_call.1']
    #allocation11 [shape = 'u8[262144]{0}', space=vmem, size = 0x40000, scoped, tag = 'output window, operand 0']
    %14 = vsyncpa [#allocation4], 0
    %s15 = scalar_lea.sflag [#allocation4], 1
    %16 = vsyncpa %s15, 0
    %17 = vsyncpa [#allocation7], 0
    %18 = vsyncpa [#allocation10], 0
    %19 = vsyncpa [#allocation5], 0
    %s20 = scalar_lea.sflag [#allocation5], 1
    %21 = vsyncpa %s20, 0
    loop: start=0, step=1, limit=4
    $region2: #{tpu_custom_call.1} parent=1 // loop_pre_header
      _
    $region3: #{tpu_custom_call.1} parent=1 // loop_header
      %s23 = sphi 0, %s27
      %p24 = scmp.ge.s32.totalorder %s23, 4
      %s33 = sphi 0, %s35
      %s36 = sphi 0, %s33
      %s37 = sphi 0, %s36
      %s53 = sphi 0, %s37
      %s57 = sphi 0, %s57
      %s59 = sphi 0, %s57
      %s60 = sphi 0, %s59
      %s74 = sphi 0, %s60
      %s78 = sphi 0, %s78
      %s80 = sphi 0, %s78
      %s81 = sphi 0, %s80
      %s95 = sphi 0, %s81
      %s99 = sphi 0, %s99
      %s101 = sphi 0, %s99
      %s102 = sphi 0, %s101
      %s116 = sphi 0, %s102
      %s120 = sphi 0, %s120
      %s122 = sphi 0, %s120
      %s123 = sphi 0, %s122
      %s137 = sphi 0, %s123
      %s141 = sphi 0, %s141
      %s143 = sphi 0, %s141
      %s144 = sphi 0, %s143
      %s158 = sphi 0, %s144
      %s162 = sphi 0, %s162
      %s164 = sphi 0, %s162
      %s165 = sphi 0, %s164
      %s179 = sphi 0, %s165
      %s183 = sphi 0, %s183
      %s185 = sphi 0, %s183
      %s186 = sphi 0, %s185
      %s200 = sphi 0, %s186
      %s206 = sphi 0, %s208
      %s209 = sphi 0, %s206
      %s210 = sphi 0, %s209
      %s226 = sphi 0, %s210
    $region4: #{tpu_custom_call.1} parent=1 // loop_header_branch
      %26 = sbr.rel (%p24) target = $region8
    $region5: #{tpu_custom_call.1} parent=1 // loop_body
      %s28 = ssub.s32 %s23, 1
      %s29 = ssub.s32 %s23, 2
      %s30 = sadd.s32 %s23, 1
      %s31 = ssub.s32 %s23, %s30
      %p32 = scmp.eq.s32.totalorder %s31, 0
      %s34 = sadd.s32 %s33, 1
      %s35 = scalar_select %p32, %s33, %s34
      %p38 = pneg %p32
      %p39 = scmp.eq.s32.totalorder %s23, 1
      %p40 = por %p38, %p39
      %p41 = scmp.ne.s32.totalorder %s33, %s36
      %p42 = scmp.eq.s32.totalorder %s23, 0
      %p43 = por %p41, %p42
      %p44 = scmp.ne.s32.totalorder %s33, %s36
      %p45 = scmp.eq.s32.totalorder %s28, 1
      %p46 = por %p44, %p45
      %p47 = scmp.ne.s32.totalorder %s36, %s37
      %p48 = scmp.eq.s32.totalorder %s28, 0
      %p49 = por %p47, %p48
      %p50 = scmp.ne.s32.totalorder %s36, %s37
      %p51 = scmp.eq.s32.totalorder %s29, 1
      %p52 = por %p50, %p51
      %p54 = scmp.ne.s32.totalorder %s37, %s53
      %p55 = scmp.eq.s32.totalorder %s29, 0
      %p56 = por %p54, %p55
      %s58 = sadd.s32 %s57, 1
      %p61 = scmp.eq.s32.totalorder %s23, 1
      %p62 = scmp.ne.s32.totalorder %s57, %s59
      %p63 = scmp.eq.s32.totalorder %s23, 0
      %p64 = por %p62, %p63
      %p65 = scmp.ne.s32.totalorder %s57, %s59
      %p66 = scmp.eq.s32.totalorder %s28, 1
      %p67 = por %p65, %p66
      %p68 = scmp.ne.s32.totalorder %s59, %s60
      %p69 = scmp.eq.s32.totalorder %s28, 0
      %p70 = por %p68, %p69
      %p71 = scmp.ne.s32.totalorder %s59, %s60
      %p72 = scmp.eq.s32.totalorder %s29, 1
      %p73 = por %p71, %p72
      %p75 = scmp.ne.s32.totalorder %s60, %s74
      %p76 = scmp.eq.s32.totalorder %s29, 0
      %p77 = por %p75, %p76
      %s79 = sadd.s32 %s78, 1
      %p82 = scmp.eq.s32.totalorder %s23, 1
      %p83 = scmp.ne.s32.totalorder %s78, %s80
      %p84 = scmp.eq.s32.totalorder %s23, 0
      %p85 = por %p83, %p84
      %p86 = scmp.ne.s32.totalorder %s78, %s80
      %p87 = scmp.eq.s32.totalorder %s28, 1
      %p88 = por %p86, %p87
      %p89 = scmp.ne.s32.totalorder %s80, %s81
      %p90 = scmp.eq.s32.totalorder %s28, 0
      %p91 = por %p89, %p90
      %p92 = scmp.ne.s32.totalorder %s80, %s81
      %p93 = scmp.eq.s32.totalorder %s29, 1
      %p94 = por %p92, %p93
      %p96 = scmp.ne.s32.totalorder %s81, %s95
      %p97 = scmp.eq.s32.totalorder %s29, 0
      %p98 = por %p96, %p97
      %s100 = sadd.s32 %s99, 1
      %p103 = scmp.eq.s32.totalorder %s23, 1
      %p104 = scmp.ne.s32.totalorder %s99, %s101
      %p105 = scmp.eq.s32.totalorder %s23, 0
      %p106 = por %p104, %p105
      %p107 = scmp.ne.s32.totalorder %s99, %s101
      %p108 = scmp.eq.s32.totalorder %s28, 1
      %p109 = por %p107, %p108
      %p110 = scmp.ne.s32.totalorder %s101, %s102
      %p111 = scmp.eq.s32.totalorder %s28, 0
      %p112 = por %p110, %p111
      %p113 = scmp.ne.s32.totalorder %s101, %s102
      %p114 = scmp.eq.s32.totalorder %s29, 1
      %p115 = por %p113, %p114
      %p117 = scmp.ne.s32.totalorder %s102, %s116
      %p118 = scmp.eq.s32.totalorder %s29, 0
      %p119 = por %p117, %p118
      %s121 = sadd.s32 %s120, 1
      %p124 = scmp.eq.s32.totalorder %s23, 1
      %p125 = scmp.ne.s32.totalorder %s120, %s122
      %p126 = scmp.eq.s32.totalorder %s23, 0
      %p127 = por %p125, %p126
      %p128 = scmp.ne.s32.totalorder %s120, %s122
      %p129 = scmp.eq.s32.totalorder %s28, 1
      %p130 = por %p128, %p129
      %p131 = scmp.ne.s32.totalorder %s122, %s123
      %p132 = scmp.eq.s32.totalorder %s28, 0
      %p133 = por %p131, %p132
      %p134 = scmp.ne.s32.totalorder %s122, %s123
      %p135 = scmp.eq.s32.totalorder %s29, 1
      %p136 = por %p134, %p135
      %p138 = scmp.ne.s32.totalorder %s123, %s137
      %p139 = scmp.eq.s32.totalorder %s29, 0
      %p140 = por %p138, %p139
      %s142 = sadd.s32 %s141, 1
      %p145 = scmp.eq.s32.totalorder %s23, 1
      %p146 = scmp.ne.s32.totalorder %s141, %s143
      %p147 = scmp.eq.s32.totalorder %s23, 0
      %p148 = por %p146, %p147
      %p149 = scmp.ne.s32.totalorder %s141, %s143
      %p150 = scmp.eq.s32.totalorder %s28, 1
      %p151 = por %p149, %p150
      %p152 = scmp.ne.s32.totalorder %s143, %s144
      %p153 = scmp.eq.s32.totalorder %s28, 0
      %p154 = por %p152, %p153
      %p155 = scmp.ne.s32.totalorder %s143, %s144
      %p156 = scmp.eq.s32.totalorder %s29, 1
      %p157 = por %p155, %p156
      %p159 = scmp.ne.s32.totalorder %s144, %s158
      %p160 = scmp.eq.s32.totalorder %s29, 0
      %p161 = por %p159, %p160
      %s163 = sadd.s32 %s162, 1
      %p166 = scmp.eq.s32.totalorder %s23, 1
      %p167 = scmp.ne.s32.totalorder %s162, %s164
      %p168 = scmp.eq.s32.totalorder %s23, 0
      %p169 = por %p167, %p168
      %p170 = scmp.ne.s32.totalorder %s162, %s164
      %p171 = scmp.eq.s32.totalorder %s28, 1
      %p172 = por %p170, %p171
      %p173 = scmp.ne.s32.totalorder %s164, %s165
      %p174 = scmp.eq.s32.totalorder %s28, 0
      %p175 = por %p173, %p174
      %p176 = scmp.ne.s32.totalorder %s164, %s165
      %p177 = scmp.eq.s32.totalorder %s29, 1
      %p178 = por %p176, %p177
      %p180 = scmp.ne.s32.totalorder %s165, %s179
      %p181 = scmp.eq.s32.totalorder %s29, 0
      %p182 = por %p180, %p181
      %s184 = sadd.s32 %s183, 1
      %p187 = scmp.eq.s32.totalorder %s23, 1
      %p188 = scmp.ne.s32.totalorder %s183, %s185
      %p189 = scmp.eq.s32.totalorder %s23, 0
      %p190 = por %p188, %p189
      %p191 = scmp.ne.s32.totalorder %s183, %s185
      %p192 = scmp.eq.s32.totalorder %s28, 1
      %p193 = por %p191, %p192
      %p194 = scmp.ne.s32.totalorder %s185, %s186
      %p195 = scmp.eq.s32.totalorder %s28, 0
      %p196 = por %p194, %p195
      %p197 = scmp.ne.s32.totalorder %s185, %s186
      %p198 = scmp.eq.s32.totalorder %s29, 1
      %p199 = por %p197, %p198
      %p201 = scmp.ne.s32.totalorder %s186, %s200
      %p202 = scmp.eq.s32.totalorder %s29, 0
      %p203 = por %p201, %p202
      %s204 = ssub.s32 %s23, %s30
      %p205 = scmp.eq.s32.totalorder %s204, 0
      %s207 = sadd.s32 %s206, 1
      %s208 = scalar_select %p205, %s206, %s207
      %p211 = pneg %p205
      %p212 = scmp.eq.s32.totalorder %s23, 1
      %p213 = por %p211, %p212
      %p214 = scmp.ne.s32.totalorder %s206, %s209
      %p215 = scmp.eq.s32.totalorder %s23, 0
      %p216 = por %p214, %p215
      %p217 = scmp.ne.s32.totalorder %s206, %s209
      %p218 = scmp.eq.s32.totalorder %s28, 1
      %p219 = por %p217, %p218
      %p220 = scmp.ne.s32.totalorder %s209, %s210
      %p221 = scmp.eq.s32.totalorder %s28, 0
      %p222 = por %p220, %p221
      %p223 = scmp.ne.s32.totalorder %s209, %s210
      %p224 = scmp.eq.s32.totalorder %s29, 1
      %p225 = por %p223, %p224
      %p227 = scmp.ne.s32.totalorder %s210, %s226
      %p228 = scmp.eq.s32.totalorder %s29, 0
      %p229 = por %p227, %p228
      %p230 = scmp.le.s32.totalorder 1, %s23
      %p231 = scmp.lt.s32.totalorder %s23, 3
      %p232 = pnand %p230, %p231
      %p233 = pneg %p232
      // Predicated region
      $region9: #{tpu_custom_call.1} parent=5 // pred_check
        _
      $region10: #{tpu_custom_call.1} parent=5 // pred_check_branch
        %235 = sbr.rel (%p232) target = $region12
      $region11: #{tpu_custom_call.1} parent=5 // pred_region
        %s236 = ssub.s32 %s23, 1
        // Predicated region
        $region13: #{tpu_custom_call.1} parent=11 // pred_check
          %p237 = pneg %p70
        $region14: #{tpu_custom_call.1} parent=11 // pred_check_branch
          %239 = sbr.rel (%p237) target = $region16
        $region15: #{tpu_custom_call.1} parent=11 // pred_region
          %s241 = ssub.s32 1024, 1024
          %242 = vsyncadd [#allocation7], %s241
          %s243 = sshll.u32 [#allocation6], 4
          %s244 = int_to_ptr.vmem [resolvable:$true] %s243
          %249 = dma.hbm_to_vmem [thread:$0]  %s1, 1024, %s244, [#allocation7], 64, 64, 4
        $region16: #{tpu_custom_call.1} parent=11 // pred_fallthru
          _
        // Predicated region
        $region17: #{tpu_custom_call.1} parent=11 // pred_check
          %p250 = pneg %p91
        $region18: #{tpu_custom_call.1} parent=11 // pred_check_branch
          %252 = sbr.rel (%p250) target = $region20
        $region19: #{tpu_custom_call.1} parent=11 // pred_region
          _
        $region20: #{tpu_custom_call.1} parent=11 // pred_fallthru
          _
        // Predicated region
        $region21: #{tpu_custom_call.1} parent=11 // pred_check
          %p253 = pneg %p112
        $region22: #{tpu_custom_call.1} parent=11 // pred_check_branch
          %255 = sbr.rel (%p253) target = $region24
        $region23: #{tpu_custom_call.1} parent=11 // pred_region
          %s257 = ssub.s32 2048, 2048
          %258 = vsyncadd [#allocation7], %s257
          %s259 = sshll.u32 [#allocation8], 4
          %s260 = int_to_ptr.vmem [resolvable:$true] %s259
          %265 = dma.hbm_to_vmem [thread:$0]  %s3, 2048, %s260, [#allocation7], 64, 64, 4
        $region24: #{tpu_custom_call.1} parent=11 // pred_fallthru
          _
        // Predicated region
        $region25: #{tpu_custom_call.1} parent=11 // pred_check
          %p266 = pneg %p133
        $region26: #{tpu_custom_call.1} parent=11 // pred_check_branch
          %268 = sbr.rel (%p266) target = $region28
        $region27: #{tpu_custom_call.1} parent=11 // pred_region
          _
        $region28: #{tpu_custom_call.1} parent=11 // pred_fallthru
          _
        // Predicated region
        $region29: #{tpu_custom_call.1} parent=11 // pred_check
          %p269 = pneg %p154
        $region30: #{tpu_custom_call.1} parent=11 // pred_check_branch
          %271 = sbr.rel (%p269) target = $region32
        $region31: #{tpu_custom_call.1} parent=11 // pred_region
          %s273 = ssub.s32 1024, 1024
          %274 = vsyncadd [#allocation10], %s273
          %s275 = sshll.u32 [#allocation9], 4
          %s276 = int_to_ptr.vmem [resolvable:$true] %s275
          %281 = dma.hbm_to_vmem [thread:$0]  %s5, 1024, %s276, [#allocation10], 64, 64, 4
        $region32: #{tpu_custom_call.1} parent=11 // pred_fallthru
          _
        // Predicated region
        $region33: #{tpu_custom_call.1} parent=11 // pred_check
          %p282 = pneg %p175
        $region34: #{tpu_custom_call.1} parent=11 // pred_check_branch
          %284 = sbr.rel (%p282) target = $region36
        $region35: #{tpu_custom_call.1} parent=11 // pred_region
          _
        $region36: #{tpu_custom_call.1} parent=11 // pred_fallthru
          _
        // Predicated region
        $region37: #{tpu_custom_call.1} parent=11 // pred_check
          %p285 = pneg %p196
        $region38: #{tpu_custom_call.1} parent=11 // pred_check_branch
          %287 = sbr.rel (%p285) target = $region40
        $region39: #{tpu_custom_call.1} parent=11 // pred_region
          _
        $region40: #{tpu_custom_call.1} parent=11 // pred_fallthru
          _
      $region12: #{tpu_custom_call.1} parent=5 // pred_fallthru
        _
      %p288 = scmp.lt.s32.totalorder %s23, 2
      // Predicated region
      $region41: #{tpu_custom_call.1} parent=5 // pred_check
        %p289 = pneg %p288
      $region42: #{tpu_custom_call.1} parent=5 // pred_check_branch
        %291 = sbr.rel (%p289) target = $region44
      $region43: #{tpu_custom_call.1} parent=5 // pred_region
        // Predicated region
        $region45: #{tpu_custom_call.1} parent=43 // pred_check
          %p292 = pneg %p43
        $region46: #{tpu_custom_call.1} parent=43 // pred_check_branch
          %294 = sbr.rel (%p292) target = $region48
        $region47: #{tpu_custom_call.1} parent=43 // pred_region
          %s295 = sand.u32 %s33, 1
          %s296 = scalar_lea.sflag [#allocation4], %s295
          %s297 = sand.u32 %s33, 1
          %s298 = smul.addr %s297, 128
          %s299 = scalar_lea.vmem [#allocation3], %s298
          %s300 = smul.u32 32, %s23
          %s302 = ssub.s32 2048, 2048
          %303 = vsyncadd %s296, %s302
          %s304 = smul.addr %s300, 64
          %s305 = scalar_lea.hbm %s0, %s304
          %s306 = sshll.u32 %s299, 4
          %s307 = int_to_ptr.vmem [resolvable:$true] %s306
          %312 = dma.hbm_to_vmem [thread:$0]  %s305, 2048, %s307, %s296, 64, 64, 4
        $region48: #{tpu_custom_call.1} parent=43 // pred_fallthru
          _
      $region44: #{tpu_custom_call.1} parent=5 // pred_fallthru
        _
      %p313 = scmp.le.s32.totalorder 1, %s23
      %p314 = scmp.lt.s32.totalorder %s23, 3
      %p315 = pnand %p313, %p314
      %p316 = pneg %p315
      // Predicated region
      $region49: #{tpu_custom_call.1} parent=5 // pred_check
        _
      $region50: #{tpu_custom_call.1} parent=5 // pred_check_branch
        %318 = sbr.rel (%p315) target = $region52
      $region51: #{tpu_custom_call.1} parent=5 // pred_region
        %s319 = ssub.s32 %s23, 1
        %s320 = sand.u32 %s36, 1
        %s321 = scalar_lea.sflag [#allocation4], %s320
        %s322 = sand.u32 %s36, 1
        %s323 = smul.addr %s322, 128
        %s324 = scalar_lea.vmem [#allocation3], %s323
        // Predicated region
        $region53: #{tpu_custom_call.1} parent=51 // pred_check
          %p325 = pneg %p49
        $region54: #{tpu_custom_call.1} parent=51 // pred_check_branch
          %327 = sbr.rel (%p325) target = $region56
        $region55: #{tpu_custom_call.1} parent=51 // pred_region
          %328 = dma.done %s321, 2048
        $region56: #{tpu_custom_call.1} parent=51 // pred_fallthru
          _
        // Predicated region
        $region57: #{tpu_custom_call.1} parent=51 // pred_check
          %p329 = pneg %p70
        $region58: #{tpu_custom_call.1} parent=51 // pred_check_branch
          %331 = sbr.rel (%p329) target = $region60
        $region59: #{tpu_custom_call.1} parent=51 // pred_region
          %332 = dma.done [#allocation7], 1024
        $region60: #{tpu_custom_call.1} parent=51 // pred_fallthru
          _
        // Predicated region
        $region61: #{tpu_custom_call.1} parent=51 // pred_check
          %p333 = pneg %p112
        $region62: #{tpu_custom_call.1} parent=51 // pred_check_branch
          %335 = sbr.rel (%p333) target = $region64
        $region63: #{tpu_custom_call.1} parent=51 // pred_region
          %336 = dma.done [#allocation7], 2048
        $region64: #{tpu_custom_call.1} parent=51 // pred_fallthru
          _
        // Predicated region
        $region65: #{tpu_custom_call.1} parent=51 // pred_check
          %p337 = pneg %p154
        $region66: #{tpu_custom_call.1} parent=51 // pred_check_branch
          %339 = sbr.rel (%p337) target = $region68
        $region67: #{tpu_custom_call.1} parent=51 // pred_region
          %340 = dma.done [#allocation10], 1024
        $region68: #{tpu_custom_call.1} parent=51 // pred_fallthru
          _
        %s341 = sand.u32 %s36, 1
        %s342 = scalar_lea.sflag [#allocation4], %s341
        %s343 = sand.u32 %s36, 1
        %s344 = smul.addr %s343, 128
        %s345 = scalar_lea.vmem [#allocation3], %s344
        %p346 = pneg %p49
        %p347 = pneg %p46
        %p348 = pneg %p70
        %p349 = pneg %p67
        %p350 = pneg %p91
        %p351 = pneg %p88
        %p352 = pneg %p112
        %p353 = pneg %p109
        %p354 = pneg %p133
        %p355 = pneg %p130
        %p356 = pneg %p154
        %p357 = pneg %p151
        %p358 = pneg %p175
        %p359 = pneg %p172
        %p360 = pneg %p196
        %p361 = pneg %p193
        %p362 = pneg %p222
        %p363 = pneg %p219
        %s364 = sand.u32 %s209, 1
        %s365 = scalar_lea.sflag [#allocation5], %s364
        %s366 = sand.u32 %s209, 1
        %s367 = smul.addr %s366, 256
        %s368 = scalar_lea.vmem [#allocation11], %s367
        %s369 = smul.u32 32, %s28
        %s370 = smul.u32 32, %s28
        %s372 = sld [smem:[#allocation2]]
        %p374 = scmp.ne.f32.partialorder %s372, %s372
        %s375 = sshrl.u32 %s372, 16
        %s376 = sand.u32 %s375, 1
        %s377 = sadd.s32 32767, %s376
        %s378 = sadd.s32 %s372, %s377
        %s379 = sand.u32 %s378, 4294901760
        %s380 = scalar_select %p374, 2143289344, %s379
        %s382 = sshrl.u32 %s380, 16
        %v383 = vld [vmem:[%s324] sm:$0xf]
        %v384 = vld [vmem:[%s324 + $0x4] sm:$0xf]
        %v385 = vld [vmem:[%s324 + $0x8] sm:$0xf]
        %v386 = vld [vmem:[%s324 + $0xc] sm:$0xf]
        %v387 = vld [vmem:[%s324 + $0x10] sm:$0xf]
        %v388 = vld [vmem:[%s324 + $0x14] sm:$0xf]
        %v389 = vld [vmem:[%s324 + $0x18] sm:$0xf]
        %v390 = vld [vmem:[%s324 + $0x1c] sm:$0xf]
        %v391 = vld [vmem:[%s324 + $0x20] sm:$0xf]
        %v392 = vld [vmem:[%s324 + $0x24] sm:$0xf]
        %v393 = vld [vmem:[%s324 + $0x28] sm:$0xf]
        %v394 = vld [vmem:[%s324 + $0x2c] sm:$0xf]
        %v395 = vld [vmem:[%s324 + $0x30] sm:$0xf]
        %v396 = vld [vmem:[%s324 + $0x34] sm:$0xf]
        %v397 = vld [vmem:[%s324 + $0x38] sm:$0xf]
        %v398 = vld [vmem:[%s324 + $0x3c] sm:$0xf]
        %v399 = vld [vmem:[%s324 + $0x40] sm:$0xf]
        %v400 = vld [vmem:[%s324 + $0x44] sm:$0xf]
        %v401 = vld [vmem:[%s324 + $0x48] sm:$0xf]
        %v402 = vld [vmem:[%s324 + $0x4c] sm:$0xf]
        %v403 = vld [vmem:[%s324 + $0x50] sm:$0xf]
        %v404 = vld [vmem:[%s324 + $0x54] sm:$0xf]
        %v405 = vld [vmem:[%s324 + $0x58] sm:$0xf]
        %v406 = vld [vmem:[%s324 + $0x5c] sm:$0xf]
        %v407 = vld [vmem:[%s324 + $0x60] sm:$0xf]
        %v408 = vld [vmem:[%s324 + $0x64] sm:$0xf]
        %v409 = vld [vmem:[%s324 + $0x68] sm:$0xf]
        %v410 = vld [vmem:[%s324 + $0x6c] sm:$0xf]
        %v411 = vld [vmem:[%s324 + $0x70] sm:$0xf]
        %v412 = vld [vmem:[%s324 + $0x74] sm:$0xf]
        %v413 = vld [vmem:[%s324 + $0x78] sm:$0xf]
        %v414 = vld [vmem:[%s324 + $0x7c] sm:$0xf]
        %v415 = vld [vmem:[#allocation6] sm:$0xf]
        %v416 = vld [vmem:[#allocation6 + $0x4] sm:$0xf]
        %v417 = vld [vmem:[#allocation6 + $0x8] sm:$0xf]
        %v418 = vld [vmem:[#allocation6 + $0xc] sm:$0xf]
        %v419 = vld [vmem:[#allocation6 + $0x10] sm:$0xf]
        %v420 = vld [vmem:[#allocation6 + $0x14] sm:$0xf]
        %v421 = vld [vmem:[#allocation6 + $0x18] sm:$0xf]
        %v422 = vld [vmem:[#allocation6 + $0x1c] sm:$0xf]
        %v423 = vld [vmem:[#allocation6 + $0x20] sm:$0xf]
        %v424 = vld [vmem:[#allocation6 + $0x24] sm:$0xf]
        %v425 = vld [vmem:[#allocation6 + $0x28] sm:$0xf]
        %v426 = vld [vmem:[#allocation6 + $0x2c] sm:$0xf]
        %v427 = vld [vmem:[#allocation6 + $0x30] sm:$0xf]
        %v428 = vld [vmem:[#allocation6 + $0x34] sm:$0xf]
        %v429 = vld [vmem:[#allocation6 + $0x38] sm:$0xf]
        %v430 = vld [vmem:[#allocation6 + $0x3c] sm:$0xf]
        %v431 = vld [vmem:[%s2] sm:$0x1]
        %v433 = vlaneseq
        %v434 = vshrl.u32 %v433, 7
        %v435 = vsub.s32 0, %v434
        %v436 = vrot.slane %v431, %v435
        %v470 = vunpack.c.l.b16 %v383
        %v471 = vunpack.c.l.b16 %v384
        %v472 = vunpack.c.l.b16 %v385
        %v473 = vunpack.c.l.b16 %v386
        %v474 = vunpack.c.l.b16 %v387
        %v475 = vunpack.c.l.b16 %v388
        %v476 = vunpack.c.l.b16 %v389
        %v477 = vunpack.c.l.b16 %v390
        %v478 = vunpack.c.l.b16 %v391
        %v479 = vunpack.c.l.b16 %v392
        %v480 = vunpack.c.l.b16 %v393
        %v481 = vunpack.c.l.b16 %v394
        %v482 = vunpack.c.l.b16 %v395
        %v483 = vunpack.c.l.b16 %v396
        %v484 = vunpack.c.l.b16 %v397
        %v485 = vunpack.c.l.b16 %v398
        %v486 = vunpack.c.l.b16 %v399
        %v487 = vunpack.c.l.b16 %v400
        %v488 = vunpack.c.l.b16 %v401
        %v489 = vunpack.c.l.b16 %v402
        %v490 = vunpack.c.l.b16 %v403
        %v491 = vunpack.c.l.b16 %v404
        %v492 = vunpack.c.l.b16 %v405
        %v493 = vunpack.c.l.b16 %v406
        %v494 = vunpack.c.l.b16 %v407
        %v495 = vunpack.c.l.b16 %v408
        %v496 = vunpack.c.l.b16 %v409
        %v497 = vunpack.c.l.b16 %v410
        %v498 = vunpack.c.l.b16 %v411
        %v499 = vunpack.c.l.b16 %v412
        %v500 = vunpack.c.l.b16 %v413
        %v501 = vunpack.c.l.b16 %v414
        %v502 = vpack.c.b16 %v471, %v470
        %v503 = vpack.c.b16 %v473, %v472
        %v504 = vpack.c.b16 %v475, %v474
        %v505 = vpack.c.b16 %v477, %v476
        %v506 = vpack.c.b16 %v479, %v478
        %v507 = vpack.c.b16 %v481, %v480
        %v508 = vpack.c.b16 %v483, %v482
        %v509 = vpack.c.b16 %v485, %v484
        %v510 = vpack.c.b16 %v487, %v486
        %v511 = vpack.c.b16 %v489, %v488
        %v512 = vpack.c.b16 %v491, %v490
        %v513 = vpack.c.b16 %v493, %v492
        %v514 = vpack.c.b16 %v495, %v494
        %v515 = vpack.c.b16 %v497, %v496
        %v516 = vpack.c.b16 %v499, %v498
        %v517 = vpack.c.b16 %v501, %v500
        %v550 = vunpack.c.l.b16 %v415
        %v551 = vunpack.c.l.b16 %v416
        %v552 = vunpack.c.l.b16 %v417
        %v553 = vunpack.c.l.b16 %v418
        %v554 = vunpack.c.l.b16 %v419
        %v555 = vunpack.c.l.b16 %v420
        %v556 = vunpack.c.l.b16 %v421
        %v557 = vunpack.c.l.b16 %v422
        %v558 = vunpack.c.l.b16 %v423
        %v559 = vunpack.c.l.b16 %v424
        %v560 = vunpack.c.l.b16 %v425
        %v561 = vunpack.c.l.b16 %v426
        %v562 = vunpack.c.l.b16 %v427
        %v563 = vunpack.c.l.b16 %v428
        %v564 = vunpack.c.l.b16 %v429
        %v565 = vunpack.c.l.b16 %v430
        %v566 = vpack.c.b16 %v551, %v550
        %v567 = vpack.c.b16 %v553, %v552
        %v568 = vpack.c.b16 %v555, %v554
        %v569 = vpack.c.b16 %v557, %v556
        %v570 = vpack.c.b16 %v559, %v558
        %v571 = vpack.c.b16 %v561, %v560
        %v572 = vpack.c.b16 %v563, %v562
        %v573 = vpack.c.b16 %v565, %v564
        %582 = vmatprep.subr.bf16.mxu0 0
        %583 = vmatpush1.bf16.msra.mxu0 %v566
        %584 = vmatprep.subr.bf16.mxu0 0
        %585 = vmatpush1.bf16.msra.mxu0 %v567
        %586 = vmatprep.subr.bf16.mxu0 0
        %587 = vmatpush1.bf16.msra.mxu0 %v568
        %588 = vmatprep.subr.bf16.mxu0 0
        %589 = vmatpush1.bf16.msra.mxu0 %v569
        %590 = vmatprep.subr.bf16.mxu0 0
        %591 = vmatpush1.bf16.msra.mxu0 %v570
        %592 = vmatprep.subr.bf16.mxu0 0
        %593 = vmatpush1.bf16.msra.mxu0 %v571
        %594 = vmatprep.subr.bf16.mxu0 0
        %595 = vmatpush1.bf16.msra.mxu0 %v572
        %596 = vmatprep.subr.bf16.mxu0 0
        %597 = vmatpush1.bf16.msra.mxu0 %v573
        %598 = vmatprep.subr.bf16.mxu0 0
        %599 = vmatpush1.bf16.msra.mxu0 0
        %600 = vmatprep.subr.bf16.mxu0 0
        %601 = vmatpush1.bf16.msra.mxu0 0
        %602 = vmatprep.subr.bf16.mxu0 0
        %603 = vmatpush1.bf16.msra.mxu0 0
        %604 = vmatprep.subr.bf16.mxu0 0
        %605 = vmatpush1.bf16.msra.mxu0 0
        %606 = vmatprep.subr.bf16.mxu0 0
        %607 = vmatpush1.bf16.msra.mxu0 0
        %608 = vmatprep.subr.bf16.mxu0 0
        %609 = vmatpush1.bf16.msra.mxu0 0
        %610 = vmatprep.subr.bf16.mxu0 0
        %611 = vmatpush1.bf16.msra.mxu0 0
        %612 = vmatprep.subr.bf16.mxu0 0
        %613 = vmatpush1.bf16.msra.mxu0 0
        %614 = vmatprep.mubr.bf16.mxu0 0
        %615 = vmatmul.mubr.bf16.gmra.mrb[0].mxu0 %v502
        %v616 = vpop.f32.mrb[0].mxu0
        %v617 = vadd.f32 %v436, %v616
        %v618 = vpop.f32.mrb[0].mxu0
        %v619 = vpop.f32.mrb[0].mxu0
        %v620 = vadd.f32 %v436, %v619
        %v621 = vpop.f32.mrb[0].mxu0
        %622 = vmatprep.mubr.bf16.mxu0 0
        %623 = vmatmul.mubr.bf16.gmra.mrb[0].mxu0 %v503
        %v624 = vpop.f32.mrb[0].mxu0
        %v625 = vadd.f32 %v436, %v624
        %v626 = vpop.f32.mrb[0].mxu0
        %v627 = vpop.f32.mrb[0].mxu0
        %v628 = vadd.f32 %v436, %v627
        %v629 = vpop.f32.mrb[0].mxu0
        %630 = vmatprep.mubr.bf16.mxu0 0
        %631 = vmatmul.mubr.bf16.gmra.mrb[0].mxu0 %v504
        %v632 = vpop.f32.mrb[0].mxu0
        %v633 = vadd.f32 %v436, %v632
        %v634 = vpop.f32.mrb[0].mxu0
        %v635 = vpop.f32.mrb[0].mxu0
        %v636 = vadd.f32 %v436, %v635
        %v637 = vpop.f32.mrb[0].mxu0
        %638 = vmatprep.mubr.bf16.mxu0 0
        %639 = vmatmul.mubr.bf16.gmra.mrb[0].mxu0 %v505
        %v640 = vpop.f32.mrb[0].mxu0
        %v641 = vadd.f32 %v436, %v640
        %v642 = vpop.f32.mrb[0].mxu0
        %v643 = vpop.f32.mrb[0].mxu0
        %v644 = vadd.f32 %v436, %v643
        %v645 = vpop.f32.mrb[0].mxu0
        %646 = vmatprep.mubr.bf16.mxu0 0
        %647 = vmatmul.mubr.bf16.gmra.mrb[0].mxu0 %v506
        %v648 = vpop.f32.mrb[0].mxu0
        %v649 = vadd.f32 %v436, %v648
        %v650 = vpop.f32.mrb[0].mxu0
        %v651 = vpop.f32.mrb[0].mxu0
        %v652 = vadd.f32 %v436, %v651
        %v653 = vpop.f32.mrb[0].mxu0
        %654 = vmatprep.mubr.bf16.mxu0 0
        %655 = vmatmul.mubr.bf16.gmra.mrb[0].mxu0 %v507
        %v656 = vpop.f32.mrb[0].mxu0
        %v657 = vadd.f32 %v436, %v656
        %v658 = vpop.f32.mrb[0].mxu0
        %v659 = vpop.f32.mrb[0].mxu0
        %v660 = vadd.f32 %v436, %v659
        %v661 = vpop.f32.mrb[0].mxu0
        %662 = vmatprep.mubr.bf16.mxu0 0
        %663 = vmatmul.mubr.bf16.gmra.mrb[0].mxu0 %v508
        %v664 = vpop.f32.mrb[0].mxu0
        %v665 = vadd.f32 %v436, %v664
        %v666 = vpop.f32.mrb[0].mxu0
        %v667 = vpop.f32.mrb[0].mxu0
        %v668 = vadd.f32 %v436, %v667
        %v669 = vpop.f32.mrb[0].mxu0
        %670 = vmatprep.mubr.bf16.mxu0 0
        %671 = vmatmul.mubr.bf16.gmra.mrb[0].mxu0 %v509
        %v672 = vpop.f32.mrb[0].mxu0
        %v673 = vadd.f32 %v436, %v672
        %v674 = vpop.f32.mrb[0].mxu0
        %v675 = vpop.f32.mrb[0].mxu0
        %v676 = vadd.f32 %v436, %v675
        %v677 = vpop.f32.mrb[0].mxu0
        %678 = vmatprep.mubr.bf16.mxu0 0
        %679 = vmatmul.mubr.bf16.gmra.mrb[0].mxu0 %v510
        %v680 = vpop.f32.mrb[0].mxu0
        %v681 = vadd.f32 %v436, %v680
        %v682 = vpop.f32.mrb[0].mxu0
        %v683 = vpop.f32.mrb[0].mxu0
        %v684 = vadd.f32 %v436, %v683
        %v685 = vpop.f32.mrb[0].mxu0
        %686 = vmatprep.mubr.bf16.mxu0 0
        %687 = vmatmul.mubr.bf16.gmra.mrb[0].mxu0 %v511
        %v688 = vpop.f32.mrb[0].mxu0
        %v689 = vadd.f32 %v436, %v688
        %v690 = vpop.f32.mrb[0].mxu0
        %v691 = vpop.f32.mrb[0].mxu0
        %v692 = vadd.f32 %v436, %v691
        %v693 = vpop.f32.mrb[0].mxu0
        %694 = vmatprep.mubr.bf16.mxu0 0
        %695 = vmatmul.mubr.bf16.gmra.mrb[0].mxu0 %v512
        %v696 = vpop.f32.mrb[0].mxu0
        %v697 = vadd.f32 %v436, %v696
        %v698 = vpop.f32.mrb[0].mxu0
        %v699 = vpop.f32.mrb[0].mxu0
        %v700 = vadd.f32 %v436, %v699
        %v701 = vpop.f32.mrb[0].mxu0
        %702 = vmatprep.mubr.bf16.mxu0 0
        %703 = vmatmul.mubr.bf16.gmra.mrb[0].mxu0 %v513
        %v704 = vpop.f32.mrb[0].mxu0
        %v705 = vadd.f32 %v436, %v704
        %v706 = vpop.f32.mrb[0].mxu0
        %v707 = vpop.f32.mrb[0].mxu0
        %v708 = vadd.f32 %v436, %v707
        %v709 = vpop.f32.mrb[0].mxu0
        %710 = vmatprep.mubr.bf16.mxu0 0
        %711 = vmatmul.mubr.bf16.gmra.mrb[0].mxu0 %v514
        %v712 = vpop.f32.mrb[0].mxu0
        %v713 = vadd.f32 %v436, %v712
        %v714 = vpop.f32.mrb[0].mxu0
        %v715 = vpop.f32.mrb[0].mxu0
        %v716 = vadd.f32 %v436, %v715
        %v717 = vpop.f32.mrb[0].mxu0
        %718 = vmatprep.mubr.bf16.mxu0 0
        %719 = vmatmul.mubr.bf16.gmra.mrb[0].mxu0 %v515
        %v720 = vpop.f32.mrb[0].mxu0
        %v721 = vadd.f32 %v436, %v720
        %v722 = vpop.f32.mrb[0].mxu0
        %v723 = vpop.f32.mrb[0].mxu0
        %v724 = vadd.f32 %v436, %v723
        %v725 = vpop.f32.mrb[0].mxu0
        %726 = vmatprep.mubr.bf16.mxu0 0
        %727 = vmatmul.mubr.bf16.gmra.mrb[0].mxu0 %v516
        %v728 = vpop.f32.mrb[0].mxu0
        %v729 = vadd.f32 %v436, %v728
        %v730 = vpop.f32.mrb[0].mxu0
        %v731 = vpop.f32.mrb[0].mxu0
        %v732 = vadd.f32 %v436, %v731
        %v733 = vpop.f32.mrb[0].mxu0
        %734 = vmatprep.mubr.bf16.mxu0 0
        %735 = vmatmul.mubr.bf16.gmra.mrb[0].mxu0 %v517
        %v736 = vpop.f32.mrb[0].mxu0
        %v737 = vadd.f32 %v436, %v736
        %v738 = vpop.f32.mrb[0].mxu0
        %v739 = vpop.f32.mrb[0].mxu0
        %v740 = vadd.f32 %v436, %v739
        %v741 = vpop.f32.mrb[0].mxu0
        %742 = vdwg.mxu0
        %v743 = vunpack.c.l.bf16 %v383
        %v744 = vunpack.c.l.bf16 %v384
        %v745 = vunpack.c.l.bf16 %v385
        %v746 = vunpack.c.l.bf16 %v386
        %v747 = vunpack.c.l.bf16 %v387
        %v748 = vunpack.c.l.bf16 %v388
        %v749 = vunpack.c.l.bf16 %v389
        %v750 = vunpack.c.l.bf16 %v390
        %v751 = vunpack.c.l.bf16 %v391
        %v752 = vunpack.c.l.bf16 %v392
        %v753 = vunpack.c.l.bf16 %v393
        %v754 = vunpack.c.l.bf16 %v394
        %v755 = vunpack.c.l.bf16 %v395
        %v756 = vunpack.c.l.bf16 %v396
        %v757 = vunpack.c.l.bf16 %v397
        %v758 = vunpack.c.l.bf16 %v398
        %v759 = vunpack.c.l.bf16 %v399
        %v760 = vunpack.c.l.bf16 %v400
        %v761 = vunpack.c.l.bf16 %v401
        %v762 = vunpack.c.l.bf16 %v402
        %v763 = vunpack.c.l.bf16 %v403
        %v764 = vunpack.c.l.bf16 %v404
        %v765 = vunpack.c.l.bf16 %v405
        %v766 = vunpack.c.l.bf16 %v406
        %v767 = vunpack.c.l.bf16 %v407
        %v768 = vunpack.c.l.bf16 %v408
        %v769 = vunpack.c.l.bf16 %v409
        %v770 = vunpack.c.l.bf16 %v410
        %v771 = vunpack.c.l.bf16 %v411
        %v772 = vunpack.c.l.bf16 %v412
        %v773 = vunpack.c.l.bf16 %v413
        %v774 = vunpack.c.l.bf16 %v414
        %v775 = vadd.f32 %v617, %v743
        %v776 = vadd.f32 %v620, %v744
        %v777 = vadd.f32 %v625, %v745
        %v778 = vadd.f32 %v628, %v746
        %v779 = vadd.f32 %v633, %v747
        %v780 = vadd.f32 %v636, %v748
        %v781 = vadd.f32 %v641, %v749
        %v782 = vadd.f32 %v644, %v750
        %v783 = vadd.f32 %v649, %v751
        %v784 = vadd.f32 %v652, %v752
        %v785 = vadd.f32 %v657, %v753
        %v786 = vadd.f32 %v660, %v754
        %v787 = vadd.f32 %v665, %v755
        %v788 = vadd.f32 %v668, %v756
        %v789 = vadd.f32 %v673, %v757
        %v790 = vadd.f32 %v676, %v758
        %v791 = vadd.f32 %v681, %v759
        %v792 = vadd.f32 %v684, %v760
        %v793 = vadd.f32 %v689, %v761
        %v794 = vadd.f32 %v692, %v762
        %v795 = vadd.f32 %v697, %v763
        %v796 = vadd.f32 %v700, %v764
        %v797 = vadd.f32 %v705, %v765
        %v798 = vadd.f32 %v708, %v766
        %v799 = vadd.f32 %v713, %v767
        %v800 = vadd.f32 %v716, %v768
        %v801 = vadd.f32 %v721, %v769
        %v802 = vadd.f32 %v724, %v770
        %v803 = vadd.f32 %v729, %v771
        %v804 = vadd.f32 %v732, %v772
        %v805 = vadd.f32 %v737, %v773
        %v806 = vadd.f32 %v740, %v774
        %v807 = vpack.c.bf16 %v776, %v775
        %v808 = vpack.c.bf16 %v778, %v777
        %v809 = vpack.c.bf16 %v780, %v779
        %v810 = vpack.c.bf16 %v782, %v781
        %v811 = vpack.c.bf16 %v784, %v783
        %v812 = vpack.c.bf16 %v786, %v785
        %v813 = vpack.c.bf16 %v788, %v787
        %v814 = vpack.c.bf16 %v790, %v789
        %v815 = vpack.c.bf16 %v792, %v791
        %v816 = vpack.c.bf16 %v794, %v793
        %v817 = vpack.c.bf16 %v796, %v795
        %v818 = vpack.c.bf16 %v798, %v797
        %v819 = vpack.c.bf16 %v800, %v799
        %v820 = vpack.c.bf16 %v802, %v801
        %v821 = vpack.c.bf16 %v804, %v803
        %v822 = vpack.c.bf16 %v806, %v805
        %vm823 = vcmp.ge.bf16.partialorder %v807, 0
        %vm824 = vcmp.ge.bf16.partialorder %v808, 0
        %vm825 = vcmp.ge.bf16.partialorder %v809, 0
        %vm826 = vcmp.ge.bf16.partialorder %v810, 0
        %vm827 = vcmp.ge.bf16.partialorder %v811, 0
        %vm828 = vcmp.ge.bf16.partialorder %v812, 0
        %vm829 = vcmp.ge.bf16.partialorder %v813, 0
        %vm830 = vcmp.ge.bf16.partialorder %v814, 0
        %vm831 = vcmp.ge.bf16.partialorder %v815, 0
        %vm832 = vcmp.ge.bf16.partialorder %v816, 0
        %vm833 = vcmp.ge.bf16.partialorder %v817, 0
        %vm834 = vcmp.ge.bf16.partialorder %v818, 0
        %vm835 = vcmp.ge.bf16.partialorder %v819, 0
        %vm836 = vcmp.ge.bf16.partialorder %v820, 0
        %vm837 = vcmp.ge.bf16.partialorder %v821, 0
        %vm838 = vcmp.ge.bf16.partialorder %v822, 0
        %s839 = sshll.u32 %s382, 16
        %s840 = sor.u32 %s382, %s839
        %v841 = vstv %s840
        %v843 = vmul.bf16 %v841, %v807
        %v844 = vmul.bf16 %v841, %v808
        %v845 = vmul.bf16 %v841, %v809
        %v846 = vmul.bf16 %v841, %v810
        %v847 = vmul.bf16 %v841, %v811
        %v848 = vmul.bf16 %v841, %v812
        %v849 = vmul.bf16 %v841, %v813
        %v850 = vmul.bf16 %v841, %v814
        %v851 = vmul.bf16 %v841, %v815
        %v852 = vmul.bf16 %v841, %v816
        %v853 = vmul.bf16 %v841, %v817
        %v854 = vmul.bf16 %v841, %v818
        %v855 = vmul.bf16 %v841, %v819
        %v856 = vmul.bf16 %v841, %v820
        %v857 = vmul.bf16 %v841, %v821
        %v858 = vmul.bf16 %v841, %v822
        %v859 = vsel %vm823, %v807, %v843
        %v860 = vsel %vm824, %v808, %v844
        %v861 = vsel %vm825, %v809, %v845
        %v862 = vsel %vm826, %v810, %v846
        %v863 = vsel %vm827, %v811, %v847
        %v864 = vsel %vm828, %v812, %v848
        %v865 = vsel %vm829, %v813, %v849
        %v866 = vsel %vm830, %v814, %v850
        %v867 = vsel %vm831, %v815, %v851
        %v868 = vsel %vm832, %v816, %v852
        %v869 = vsel %vm833, %v817, %v853
        %v870 = vsel %vm834, %v818, %v854
        %v871 = vsel %vm835, %v819, %v855
        %v872 = vsel %vm836, %v820, %v856
        %v873 = vsel %vm837, %v821, %v857
        %v874 = vsel %vm838, %v822, %v858
        %v875 = vadd.bf16 %v859, %v807
        %v876 = vadd.bf16 %v860, %v808
        %v877 = vadd.bf16 %v861, %v809
        %v878 = vadd.bf16 %v862, %v810
        %v879 = vadd.bf16 %v863, %v811
        %v880 = vadd.bf16 %v864, %v812
        %v881 = vadd.bf16 %v865, %v813
        %v882 = vadd.bf16 %v866, %v814
        %v883 = vadd.bf16 %v867, %v815
        %v884 = vadd.bf16 %v868, %v816
        %v885 = vadd.bf16 %v869, %v817
        %v886 = vadd.bf16 %v870, %v818
        %v887 = vadd.bf16 %v871, %v819
        %v888 = vadd.bf16 %v872, %v820
        %v889 = vadd.bf16 %v873, %v821
        %v890 = vadd.bf16 %v874, %v822
        %v891 = vld [vmem:[#allocation8] sm:$0xf]
        %v892 = vld [vmem:[#allocation8 + $0x4] sm:$0xf]
        %v893 = vld [vmem:[#allocation8 + $0x8] sm:$0xf]
        %v894 = vld [vmem:[#allocation8 + $0xc] sm:$0xf]
        %v895 = vld [vmem:[#allocation8 + $0x10] sm:$0xf]
        %v896 = vld [vmem:[#allocation8 + $0x14] sm:$0xf]
        %v897 = vld [vmem:[#allocation8 + $0x18] sm:$0xf]
        %v898 = vld [vmem:[#allocation8 + $0x1c] sm:$0xf]
        %v899 = vld [vmem:[#allocation8 + $0x20] sm:$0xf]
        %v900 = vld [vmem:[#allocation8 + $0x24] sm:$0xf]
        %v901 = vld [vmem:[#allocation8 + $0x28] sm:$0xf]
        %v902 = vld [vmem:[#allocation8 + $0x2c] sm:$0xf]
        %v903 = vld [vmem:[#allocation8 + $0x30] sm:$0xf]
        %v904 = vld [vmem:[#allocation8 + $0x34] sm:$0xf]
        %v905 = vld [vmem:[#allocation8 + $0x38] sm:$0xf]
        %v906 = vld [vmem:[#allocation8 + $0x3c] sm:$0xf]
        %v907 = vld [vmem:[%s4] sm:$0x1]
        %v909 = vlaneseq
        %v910 = vshrl.u32 %v909, 7
        %v911 = vsub.s32 0, %v910
        %v912 = vrot.slane %v907, %v911
        %v930 = vunpack.c.l.b16 %v891
        %v931 = vunpack.c.l.b16 %v892
        %v932 = vunpack.c.l.b16 %v893
        %v933 = vunpack.c.l.b16 %v894
        %v934 = vunpack.c.l.b16 %v895
        %v935 = vunpack.c.l.b16 %v896
        %v936 = vunpack.c.l.b16 %v897
        %v937 = vunpack.c.l.b16 %v898
        %v938 = vunpack.c.l.b16 %v899
        %v939 = vunpack.c.l.b16 %v900
        %v940 = vunpack.c.l.b16 %v901
        %v941 = vunpack.c.l.b16 %v902
        %v942 = vunpack.c.l.b16 %v903
        %v943 = vunpack.c.l.b16 %v904
        %v944 = vunpack.c.l.b16 %v905
        %v945 = vunpack.c.l.b16 %v906
        %v946 = vpack.c.b16 %v931, %v930
        %v947 = vpack.c.b16 %v933, %v932
        %v948 = vpack.c.b16 %v935, %v934
        %v949 = vpack.c.b16 %v937, %v936
        %v950 = vpack.c.b16 %v939, %v938
        %v951 = vpack.c.b16 %v941, %v940
        %v952 = vpack.c.b16 %v943, %v942
        %v953 = vpack.c.b16 %v945, %v944
        %962 = vmatprep.subr.bf16.mxu0 0
        %963 = vmatpush1.bf16.msra.mxu0 %v946
        %964 = vmatprep.subr.bf16.mxu0 0
        %965 = vmatpush1.bf16.msra.mxu0 %v947
        %966 = vmatprep.subr.bf16.mxu0 0
        %967 = vmatpush1.bf16.msra.mxu0 %v948
        %968 = vmatprep.subr.bf16.mxu0 0
        %969 = vmatpush1.bf16.msra.mxu0 %v949
        %970 = vmatprep.subr.bf16.mxu0 0
        %971 = vmatpush1.bf16.msra.mxu0 %v950
        %972 = vmatprep.subr.bf16.mxu0 0
        %973 = vmatpush1.bf16.msra.mxu0 %v951
        %974 = vmatprep.subr.bf16.mxu0 0
        %975 = vmatpush1.bf16.msra.mxu0 %v952
        %976 = vmatprep.subr.bf16.mxu0 0
        %977 = vmatpush1.bf16.msra.mxu0 %v953
        %978 = vmatprep.subr.bf16.mxu0 0
        %979 = vmatpush1.bf16.msra.mxu0 0
        %980 = vmatprep.subr.bf16.mxu0 0
        %981 = vmatpush1.bf16.msra.mxu0 0
        %982 = vmatprep.subr.bf16.mxu0 0
        %983 = vmatpush1.bf16.msra.mxu0 0
        %984 = vmatprep.subr.bf16.mxu0 0
        %985 = vmatpush1.bf16.msra.mxu0 0
        %986 = vmatprep.subr.bf16.mxu0 0
        %987 = vmatpush1.bf16.msra.mxu0 0
        %988 = vmatprep.subr.bf16.mxu0 0
        %989 = vmatpush1.bf16.msra.mxu0 0
        %990 = vmatprep.subr.bf16.mxu0 0
        %991 = vmatpush1.bf16.msra.mxu0 0
        %992 = vmatprep.subr.bf16.mxu0 0
        %993 = vmatpush1.bf16.msra.mxu0 0
        %994 = vmatprep.mubr.bf16.mxu0 0
        %995 = vmatmul.mubr.bf16.gmra.mrb[0].mxu0 %v875
        %v996 = vpop.f32.mrb[0].mxu0
        %v997 = vadd.f32 %v912, %v996
        %v998 = vpop.f32.mrb[0].mxu0
        %v999 = vpop.f32.mrb[0].mxu0
        %v1000 = vadd.f32 %v912, %v999
        %v1001 = vpop.f32.mrb[0].mxu0
        %1002 = vmatprep.mubr.bf16.mxu0 0
        %1003 = vmatmul.mubr.bf16.gmra.mrb[0].mxu0 %v876
        %v1004 = vpop.f32.mrb[0].mxu0
        %v1005 = vadd.f32 %v912, %v1004
        %v1006 = vpop.f32.mrb[0].mxu0
        %v1007 = vpop.f32.mrb[0].mxu0
        %v1008 = vadd.f32 %v912, %v1007
        %v1009 = vpop.f32.mrb[0].mxu0
        %1010 = vmatprep.mubr.bf16.mxu0 0
        %1011 = vmatmul.mubr.bf16.gmra.mrb[0].mxu0 %v877
        %v1012 = vpop.f32.mrb[0].mxu0
        %v1013 = vadd.f32 %v912, %v1012
        %v1014 = vpop.f32.mrb[0].mxu0
        %v1015 = vpop.f32.mrb[0].mxu0
        %v1016 = vadd.f32 %v912, %v1015
        %v1017 = vpop.f32.mrb[0].mxu0
        %1018 = vmatprep.mubr.bf16.mxu0 0
        %1019 = vmatmul.mubr.bf16.gmra.mrb[0].mxu0 %v878
        %v1020 = vpop.f32.mrb[0].mxu0
        %v1021 = vadd.f32 %v912, %v1020
        %v1022 = vpop.f32.mrb[0].mxu0
        %v1023 = vpop.f32.mrb[0].mxu0
        %v1024 = vadd.f32 %v912, %v1023
        %v1025 = vpop.f32.mrb[0].mxu0
        %1026 = vmatprep.mubr.bf16.mxu0 0
        %1027 = vmatmul.mubr.bf16.gmra.mrb[0].mxu0 %v879
        %v1028 = vpop.f32.mrb[0].mxu0
        %v1029 = vadd.f32 %v912, %v1028
        %v1030 = vpop.f32.mrb[0].mxu0
        %v1031 = vpop.f32.mrb[0].mxu0
        %v1032 = vadd.f32 %v912, %v1031
        %v1033 = vpop.f32.mrb[0].mxu0
        %1034 = vmatprep.mubr.bf16.mxu0 0
        %1035 = vmatmul.mubr.bf16.gmra.mrb[0].mxu0 %v880
        %v1036 = vpop.f32.mrb[0].mxu0
        %v1037 = vadd.f32 %v912, %v1036
        %v1038 = vpop.f32.mrb[0].mxu0
        %v1039 = vpop.f32.mrb[0].mxu0
        %v1040 = vadd.f32 %v912, %v1039
        %v1041 = vpop.f32.mrb[0].mxu0
        %1042 = vmatprep.mubr.bf16.mxu0 0
        %1043 = vmatmul.mubr.bf16.gmra.mrb[0].mxu0 %v881
        %v1044 = vpop.f32.mrb[0].mxu0
        %v1045 = vadd.f32 %v912, %v1044
        %v1046 = vpop.f32.mrb[0].mxu0
        %v1047 = vpop.f32.mrb[0].mxu0
        %v1048 = vadd.f32 %v912, %v1047
        %v1049 = vpop.f32.mrb[0].mxu0
        %1050 = vmatprep.mubr.bf16.mxu0 0
        %1051 = vmatmul.mubr.bf16.gmra.mrb[0].mxu0 %v882
        %v1052 = vpop.f32.mrb[0].mxu0
        %v1053 = vadd.f32 %v912, %v1052
        %v1054 = vpop.f32.mrb[0].mxu0
        %v1055 = vpop.f32.mrb[0].mxu0
        %v1056 = vadd.f32 %v912, %v1055
        %v1057 = vpop.f32.mrb[0].mxu0
        %1058 = vmatprep.mubr.bf16.mxu0 0
        %1059 = vmatmul.mubr.bf16.gmra.mrb[0].mxu0 %v883
        %v1060 = vpop.f32.mrb[0].mxu0
        %v1061 = vadd.f32 %v912, %v1060
        %v1062 = vpop.f32.mrb[0].mxu0
        %v1063 = vpop.f32.mrb[0].mxu0
        %v1064 = vadd.f32 %v912, %v1063
        %v1065 = vpop.f32.mrb[0].mxu0
        %1066 = vmatprep.mubr.bf16.mxu0 0
        %1067 = vmatmul.mubr.bf16.gmra.mrb[0].mxu0 %v884
        %v1068 = vpop.f32.mrb[0].mxu0
        %v1069 = vadd.f32 %v912, %v1068
        %v1070 = vpop.f32.mrb[0].mxu0
        %v1071 = vpop.f32.mrb[0].mxu0
        %v1072 = vadd.f32 %v912, %v1071
        %v1073 = vpop.f32.mrb[0].mxu0
        %1074 = vmatprep.mubr.bf16.mxu0 0
        %1075 = vmatmul.mubr.bf16.gmra.mrb[0].mxu0 %v885
        %v1076 = vpop.f32.mrb[0].mxu0
        %v1077 = vadd.f32 %v912, %v1076
        %v1078 = vpop.f32.mrb[0].mxu0
        %v1079 = vpop.f32.mrb[0].mxu0
        %v1080 = vadd.f32 %v912, %v1079
        %v1081 = vpop.f32.mrb[0].mxu0
        %1082 = vmatprep.mubr.bf16.mxu0 0
        %1083 = vmatmul.mubr.bf16.gmra.mrb[0].mxu0 %v886
        %v1084 = vpop.f32.mrb[0].mxu0
        %v1085 = vadd.f32 %v912, %v1084
        %v1086 = vpop.f32.mrb[0].mxu0
        %v1087 = vpop.f32.mrb[0].mxu0
        %v1088 = vadd.f32 %v912, %v1087
        %v1089 = vpop.f32.mrb[0].mxu0
        %1090 = vmatprep.mubr.bf16.mxu0 0
        %1091 = vmatmul.mubr.bf16.gmra.mrb[0].mxu0 %v887
        %v1092 = vpop.f32.mrb[0].mxu0
        %v1093 = vadd.f32 %v912, %v1092
        %v1094 = vpop.f32.mrb[0].mxu0
        %v1095 = vpop.f32.mrb[0].mxu0
        %v1096 = vadd.f32 %v912, %v1095
        %v1097 = vpop.f32.mrb[0].mxu0
        %1098 = vmatprep.mubr.bf16.mxu0 0
        %1099 = vmatmul.mubr.bf16.gmra.mrb[0].mxu0 %v888
        %v1100 = vpop.f32.mrb[0].mxu0
        %v1101 = vadd.f32 %v912, %v1100
        %v1102 = vpop.f32.mrb[0].mxu0
        %v1103 = vpop.f32.mrb[0].mxu0
        %v1104 = vadd.f32 %v912, %v1103
        %v1105 = vpop.f32.mrb[0].mxu0
        %1106 = vmatprep.mubr.bf16.mxu0 0
        %1107 = vmatmul.mubr.bf16.gmra.mrb[0].mxu0 %v889
        %v1108 = vpop.f32.mrb[0].mxu0
        %v1109 = vadd.f32 %v912, %v1108
        %v1110 = vpop.f32.mrb[0].mxu0
        %v1111 = vpop.f32.mrb[0].mxu0
        %v1112 = vadd.f32 %v912, %v1111
        %v1113 = vpop.f32.mrb[0].mxu0
        %1114 = vmatprep.mubr.bf16.mxu0 0
        %1115 = vmatmul.mubr.bf16.gmra.mrb[0].mxu0 %v890
        %v1116 = vpop.f32.mrb[0].mxu0
        %v1117 = vadd.f32 %v912, %v1116
        %v1118 = vpop.f32.mrb[0].mxu0
        %v1119 = vpop.f32.mrb[0].mxu0
        %v1120 = vadd.f32 %v912, %v1119
        %v1121 = vpop.f32.mrb[0].mxu0
        %1122 = vdwg.mxu0
        %v1123 = vunpack.c.l.bf16 %v859
        %v1124 = vunpack.c.h.bf16 %v859
        %v1125 = vunpack.c.l.bf16 %v860
        %v1126 = vunpack.c.h.bf16 %v860
        %v1127 = vunpack.c.l.bf16 %v861
        %v1128 = vunpack.c.h.bf16 %v861
        %v1129 = vunpack.c.l.bf16 %v862
        %v1130 = vunpack.c.h.bf16 %v862
        %v1131 = vunpack.c.l.bf16 %v863
        %v1132 = vunpack.c.h.bf16 %v863
        %v1133 = vunpack.c.l.bf16 %v864
        %v1134 = vunpack.c.h.bf16 %v864
        %v1135 = vunpack.c.l.bf16 %v865
        %v1136 = vunpack.c.h.bf16 %v865
        %v1137 = vunpack.c.l.bf16 %v866
        %v1138 = vunpack.c.h.bf16 %v866
        %v1139 = vunpack.c.l.bf16 %v867
        %v1140 = vunpack.c.h.bf16 %v867
        %v1141 = vunpack.c.l.bf16 %v868
        %v1142 = vunpack.c.h.bf16 %v868
        %v1143 = vunpack.c.l.bf16 %v869
        %v1144 = vunpack.c.h.bf16 %v869
        %v1145 = vunpack.c.l.bf16 %v870
        %v1146 = vunpack.c.h.bf16 %v870
        %v1147 = vunpack.c.l.bf16 %v871
        %v1148 = vunpack.c.h.bf16 %v871
        %v1149 = vunpack.c.l.bf16 %v872
        %v1150 = vunpack.c.h.bf16 %v872
        %v1151 = vunpack.c.l.bf16 %v873
        %v1152 = vunpack.c.h.bf16 %v873
        %v1153 = vunpack.c.l.bf16 %v874
        %v1154 = vunpack.c.h.bf16 %v874
        %v1155 = vadd.f32 %v997, %v1123
        %v1156 = vadd.f32 %v1000, %v1124
        %v1157 = vadd.f32 %v1005, %v1125
        %v1158 = vadd.f32 %v1008, %v1126
        %v1159 = vadd.f32 %v1013, %v1127
        %v1160 = vadd.f32 %v1016, %v1128
        %v1161 = vadd.f32 %v1021, %v1129
        %v1162 = vadd.f32 %v1024, %v1130
        %v1163 = vadd.f32 %v1029, %v1131
        %v1164 = vadd.f32 %v1032, %v1132
        %v1165 = vadd.f32 %v1037, %v1133
        %v1166 = vadd.f32 %v1040, %v1134
        %v1167 = vadd.f32 %v1045, %v1135
        %v1168 = vadd.f32 %v1048, %v1136
        %v1169 = vadd.f32 %v1053, %v1137
        %v1170 = vadd.f32 %v1056, %v1138
        %v1171 = vadd.f32 %v1061, %v1139
        %v1172 = vadd.f32 %v1064, %v1140
        %v1173 = vadd.f32 %v1069, %v1141
        %v1174 = vadd.f32 %v1072, %v1142
        %v1175 = vadd.f32 %v1077, %v1143
        %v1176 = vadd.f32 %v1080, %v1144
        %v1177 = vadd.f32 %v1085, %v1145
        %v1178 = vadd.f32 %v1088, %v1146
        %v1179 = vadd.f32 %v1093, %v1147
        %v1180 = vadd.f32 %v1096, %v1148
        %v1181 = vadd.f32 %v1101, %v1149
        %v1182 = vadd.f32 %v1104, %v1150
        %v1183 = vadd.f32 %v1109, %v1151
        %v1184 = vadd.f32 %v1112, %v1152
        %v1185 = vadd.f32 %v1117, %v1153
        %v1186 = vadd.f32 %v1120, %v1154
        %v1187 = vpack.c.bf16 %v1156, %v1155
        %v1188 = vpack.c.bf16 %v1158, %v1157
        %v1189 = vpack.c.bf16 %v1160, %v1159
        %v1190 = vpack.c.bf16 %v1162, %v1161
        %v1191 = vpack.c.bf16 %v1164, %v1163
        %v1192 = vpack.c.bf16 %v1166, %v1165
        %v1193 = vpack.c.bf16 %v1168, %v1167
        %v1194 = vpack.c.bf16 %v1170, %v1169
        %v1195 = vpack.c.bf16 %v1172, %v1171
        %v1196 = vpack.c.bf16 %v1174, %v1173
        %v1197 = vpack.c.bf16 %v1176, %v1175
        %v1198 = vpack.c.bf16 %v1178, %v1177
        %v1199 = vpack.c.bf16 %v1180, %v1179
        %v1200 = vpack.c.bf16 %v1182, %v1181
        %v1201 = vpack.c.bf16 %v1184, %v1183
        %v1202 = vpack.c.bf16 %v1186, %v1185
        %vm1203 = vcmp.ge.bf16.partialorder %v1187, 0
        %vm1204 = vcmp.ge.bf16.partialorder %v1188, 0
        %vm1205 = vcmp.ge.bf16.partialorder %v1189, 0
        %vm1206 = vcmp.ge.bf16.partialorder %v1190, 0
        %vm1207 = vcmp.ge.bf16.partialorder %v1191, 0
        %vm1208 = vcmp.ge.bf16.partialorder %v1192, 0
        %vm1209 = vcmp.ge.bf16.partialorder %v1193, 0
        %vm1210 = vcmp.ge.bf16.partialorder %v1194, 0
        %vm1211 = vcmp.ge.bf16.partialorder %v1195, 0
        %vm1212 = vcmp.ge.bf16.partialorder %v1196, 0
        %vm1213 = vcmp.ge.bf16.partialorder %v1197, 0
        %vm1214 = vcmp.ge.bf16.partialorder %v1198, 0
        %vm1215 = vcmp.ge.bf16.partialorder %v1199, 0
        %vm1216 = vcmp.ge.bf16.partialorder %v1200, 0
        %vm1217 = vcmp.ge.bf16.partialorder %v1201, 0
        %vm1218 = vcmp.ge.bf16.partialorder %v1202, 0
        %v1219 = vmul.bf16 %v841, %v1187
        %v1220 = vmul.bf16 %v841, %v1188
        %v1221 = vmul.bf16 %v841, %v1189
        %v1222 = vmul.bf16 %v841, %v1190
        %v1223 = vmul.bf16 %v841, %v1191
        %v1224 = vmul.bf16 %v841, %v1192
        %v1225 = vmul.bf16 %v841, %v1193
        %v1226 = vmul.bf16 %v841, %v1194
        %v1227 = vmul.bf16 %v841, %v1195
        %v1228 = vmul.bf16 %v841, %v1196
        %v1229 = vmul.bf16 %v841, %v1197
        %v1230 = vmul.bf16 %v841, %v1198
        %v1231 = vmul.bf16 %v841, %v1199
        %v1232 = vmul.bf16 %v841, %v1200
        %v1233 = vmul.bf16 %v841, %v1201
        %v1234 = vmul.bf16 %v841, %v1202
        %v1235 = vsel %vm1203, %v1187, %v1219
        %v1236 = vsel %vm1204, %v1188, %v1220
        %v1237 = vsel %vm1205, %v1189, %v1221
        %v1238 = vsel %vm1206, %v1190, %v1222
        %v1239 = vsel %vm1207, %v1191, %v1223
        %v1240 = vsel %vm1208, %v1192, %v1224
        %v1241 = vsel %vm1209, %v1193, %v1225
        %v1242 = vsel %vm1210, %v1194, %v1226
        %v1243 = vsel %vm1211, %v1195, %v1227
        %v1244 = vsel %vm1212, %v1196, %v1228
        %v1245 = vsel %vm1213, %v1197, %v1229
        %v1246 = vsel %vm1214, %v1198, %v1230
        %v1247 = vsel %vm1215, %v1199, %v1231
        %v1248 = vsel %vm1216, %v1200, %v1232
        %v1249 = vsel %vm1217, %v1201, %v1233
        %v1250 = vsel %vm1218, %v1202, %v1234
        %v1251 = vadd.bf16 %v1235, %v807
        %v1252 = vadd.bf16 %v1236, %v808
        %v1253 = vadd.bf16 %v1237, %v809
        %v1254 = vadd.bf16 %v1238, %v810
        %v1255 = vadd.bf16 %v1239, %v811
        %v1256 = vadd.bf16 %v1240, %v812
        %v1257 = vadd.bf16 %v1241, %v813
        %v1258 = vadd.bf16 %v1242, %v814
        %v1259 = vadd.bf16 %v1243, %v815
        %v1260 = vadd.bf16 %v1244, %v816
        %v1261 = vadd.bf16 %v1245, %v817
        %v1262 = vadd.bf16 %v1246, %v818
        %v1263 = vadd.bf16 %v1247, %v819
        %v1264 = vadd.bf16 %v1248, %v820
        %v1265 = vadd.bf16 %v1249, %v821
        %v1266 = vadd.bf16 %v1250, %v822
        %s1267 = scalar_lea.vmem [#allocation8], 64
        %v1268 = vld [vmem:[%s1267] sm:$0xf]
        %v1269 = vld [vmem:[%s1267 + $0x4] sm:$0xf]
        %v1270 = vld [vmem:[%s1267 + $0x8] sm:$0xf]
        %v1271 = vld [vmem:[%s1267 + $0xc] sm:$0xf]
        %v1272 = vld [vmem:[%s1267 + $0x10] sm:$0xf]
        %v1273 = vld [vmem:[%s1267 + $0x14] sm:$0xf]
        %v1274 = vld [vmem:[%s1267 + $0x18] sm:$0xf]
        %v1275 = vld [vmem:[%s1267 + $0x1c] sm:$0xf]
        %v1276 = vld [vmem:[%s1267 + $0x20] sm:$0xf]
        %v1277 = vld [vmem:[%s1267 + $0x24] sm:$0xf]
        %v1278 = vld [vmem:[%s1267 + $0x28] sm:$0xf]
        %v1279 = vld [vmem:[%s1267 + $0x2c] sm:$0xf]
        %v1280 = vld [vmem:[%s1267 + $0x30] sm:$0xf]
        %v1281 = vld [vmem:[%s1267 + $0x34] sm:$0xf]
        %v1282 = vld [vmem:[%s1267 + $0x38] sm:$0xf]
        %v1283 = vld [vmem:[%s1267 + $0x3c] sm:$0xf]
        %s1284 = scalar_lea.vmem %s4, 1
        %v1285 = vld [vmem:[%s1284] sm:$0x1]
        %v1287 = vlaneseq
        %v1288 = vshrl.u32 %v1287, 7
        %v1289 = vsub.s32 0, %v1288
        %v1290 = vrot.slane %v1285, %v1289
        %v1308 = vunpack.c.l.b16 %v1268
        %v1309 = vunpack.c.l.b16 %v1269
        %v1310 = vunpack.c.l.b16 %v1270
        %v1311 = vunpack.c.l.b16 %v1271
        %v1312 = vunpack.c.l.b16 %v1272
        %v1313 = vunpack.c.l.b16 %v1273
        %v1314 = vunpack.c.l.b16 %v1274
        %v1315 = vunpack.c.l.b16 %v1275
        %v1316 = vunpack.c.l.b16 %v1276
        %v1317 = vunpack.c.l.b16 %v1277
        %v1318 = vunpack.c.l.b16 %v1278
        %v1319 = vunpack.c.l.b16 %v1279
        %v1320 = vunpack.c.l.b16 %v1280
        %v1321 = vunpack.c.l.b16 %v1281
        %v1322 = vunpack.c.l.b16 %v1282
        %v1323 = vunpack.c.l.b16 %v1283
        %v1324 = vpack.c.b16 %v1309, %v1308
        %v1325 = vpack.c.b16 %v1311, %v1310
        %v1326 = vpack.c.b16 %v1313, %v1312
        %v1327 = vpack.c.b16 %v1315, %v1314
        %v1328 = vpack.c.b16 %v1317, %v1316
        %v1329 = vpack.c.b16 %v1319, %v1318
        %v1330 = vpack.c.b16 %v1321, %v1320
        %v1331 = vpack.c.b16 %v1323, %v1322
        %1340 = vmatprep.subr.bf16.mxu0 0
        %1341 = vmatpush1.bf16.msra.mxu0 %v1324
        %1342 = vmatprep.subr.bf16.mxu0 0
        %1343 = vmatpush1.bf16.msra.mxu0 %v1325
        %1344 = vmatprep.subr.bf16.mxu0 0
        %1345 = vmatpush1.bf16.msra.mxu0 %v1326
        %1346 = vmatprep.subr.bf16.mxu0 0
        %1347 = vmatpush1.bf16.msra.mxu0 %v1327
        %1348 = vmatprep.subr.bf16.mxu0 0
        %1349 = vmatpush1.bf16.msra.mxu0 %v1328
        %1350 = vmatprep.subr.bf16.mxu0 0
        %1351 = vmatpush1.bf16.msra.mxu0 %v1329
        %1352 = vmatprep.subr.bf16.mxu0 0
        %1353 = vmatpush1.bf16.msra.mxu0 %v1330
        %1354 = vmatprep.subr.bf16.mxu0 0
        %1355 = vmatpush1.bf16.msra.mxu0 %v1331
        %1356 = vmatprep.subr.bf16.mxu0 0
        %1357 = vmatpush1.bf16.msra.mxu0 0
        %1358 = vmatprep.subr.bf16.mxu0 0
        %1359 = vmatpush1.bf16.msra.mxu0 0
        %1360 = vmatprep.subr.bf16.mxu0 0
        %1361 = vmatpush1.bf16.msra.mxu0 0
        %1362 = vmatprep.subr.bf16.mxu0 0
        %1363 = vmatpush1.bf16.msra.mxu0 0
        %1364 = vmatprep.subr.bf16.mxu0 0
        %1365 = vmatpush1.bf16.msra.mxu0 0
        %1366 = vmatprep.subr.bf16.mxu0 0
        %1367 = vmatpush1.bf16.msra.mxu0 0
        %1368 = vmatprep.subr.bf16.mxu0 0
        %1369 = vmatpush1.bf16.msra.mxu0 0
        %1370 = vmatprep.subr.bf16.mxu0 0
        %1371 = vmatpush1.bf16.msra.mxu0 0
        %1372 = vmatprep.mubr.bf16.mxu0 0
        %1373 = vmatmul.mubr.bf16.gmra.mrb[0].mxu0 %v1251
        %v1374 = vpop.f32.mrb[0].mxu0
        %v1375 = vadd.f32 %v1290, %v1374
        %v1376 = vpop.f32.mrb[0].mxu0
        %v1377 = vpop.f32.mrb[0].mxu0
        %v1378 = vadd.f32 %v1290, %v1377
        %v1379 = vpop.f32.mrb[0].mxu0
        %1380 = vmatprep.mubr.bf16.mxu0 0
        %1381 = vmatmul.mubr.bf16.gmra.mrb[0].mxu0 %v1252
        %v1382 = vpop.f32.mrb[0].mxu0
        %v1383 = vadd.f32 %v1290, %v1382
        %v1384 = vpop.f32.mrb[0].mxu0
        %v1385 = vpop.f32.mrb[0].mxu0
        %v1386 = vadd.f32 %v1290, %v1385
        %v1387 = vpop.f32.mrb[0].mxu0
        %1388 = vmatprep.mubr.bf16.mxu0 0
        %1389 = vmatmul.mubr.bf16.gmra.mrb[0].mxu0 %v1253
        %v1390 = vpop.f32.mrb[0].mxu0
        %v1391 = vadd.f32 %v1290, %v1390
        %v1392 = vpop.f32.mrb[0].mxu0
        %v1393 = vpop.f32.mrb[0].mxu0
        %v1394 = vadd.f32 %v1290, %v1393
        %v1395 = vpop.f32.mrb[0].mxu0
        %1396 = vmatprep.mubr.bf16.mxu0 0
        %1397 = vmatmul.mubr.bf16.gmra.mrb[0].mxu0 %v1254
        %v1398 = vpop.f32.mrb[0].mxu0
        %v1399 = vadd.f32 %v1290, %v1398
        %v1400 = vpop.f32.mrb[0].mxu0
        %v1401 = vpop.f32.mrb[0].mxu0
        %v1402 = vadd.f32 %v1290, %v1401
        %v1403 = vpop.f32.mrb[0].mxu0
        %1404 = vmatprep.mubr.bf16.mxu0 0
        %1405 = vmatmul.mubr.bf16.gmra.mrb[0].mxu0 %v1255
        %v1406 = vpop.f32.mrb[0].mxu0
        %v1407 = vadd.f32 %v1290, %v1406
        %v1408 = vpop.f32.mrb[0].mxu0
        %v1409 = vpop.f32.mrb[0].mxu0
        %v1410 = vadd.f32 %v1290, %v1409
        %v1411 = vpop.f32.mrb[0].mxu0
        %1412 = vmatprep.mubr.bf16.mxu0 0
        %1413 = vmatmul.mubr.bf16.gmra.mrb[0].mxu0 %v1256
        %v1414 = vpop.f32.mrb[0].mxu0
        %v1415 = vadd.f32 %v1290, %v1414
        %v1416 = vpop.f32.mrb[0].mxu0
        %v1417 = vpop.f32.mrb[0].mxu0
        %v1418 = vadd.f32 %v1290, %v1417
        %v1419 = vpop.f32.mrb[0].mxu0
        %1420 = vmatprep.mubr.bf16.mxu0 0
        %1421 = vmatmul.mubr.bf16.gmra.mrb[0].mxu0 %v1257
        %v1422 = vpop.f32.mrb[0].mxu0
        %v1423 = vadd.f32 %v1290, %v1422
        %v1424 = vpop.f32.mrb[0].mxu0
        %v1425 = vpop.f32.mrb[0].mxu0
        %v1426 = vadd.f32 %v1290, %v1425
        %v1427 = vpop.f32.mrb[0].mxu0
        %1428 = vmatprep.mubr.bf16.mxu0 0
        %1429 = vmatmul.mubr.bf16.gmra.mrb[0].mxu0 %v1258
        %v1430 = vpop.f32.mrb[0].mxu0
        %v1431 = vadd.f32 %v1290, %v1430
        %v1432 = vpop.f32.mrb[0].mxu0
        %v1433 = vpop.f32.mrb[0].mxu0
        %v1434 = vadd.f32 %v1290, %v1433
        %v1435 = vpop.f32.mrb[0].mxu0
        %1436 = vmatprep.mubr.bf16.mxu0 0
        %1437 = vmatmul.mubr.bf16.gmra.mrb[0].mxu0 %v1259
        %v1438 = vpop.f32.mrb[0].mxu0
        %v1439 = vadd.f32 %v1290, %v1438
        %v1440 = vpop.f32.mrb[0].mxu0
        %v1441 = vpop.f32.mrb[0].mxu0
        %v1442 = vadd.f32 %v1290, %v1441
        %v1443 = vpop.f32.mrb[0].mxu0
        %1444 = vmatprep.mubr.bf16.mxu0 0
        %1445 = vmatmul.mubr.bf16.gmra.mrb[0].mxu0 %v1260
        %v1446 = vpop.f32.mrb[0].mxu0
        %v1447 = vadd.f32 %v1290, %v1446
        %v1448 = vpop.f32.mrb[0].mxu0
        %v1449 = vpop.f32.mrb[0].mxu0
        %v1450 = vadd.f32 %v1290, %v1449
        %v1451 = vpop.f32.mrb[0].mxu0
        %1452 = vmatprep.mubr.bf16.mxu0 0
        %1453 = vmatmul.mubr.bf16.gmra.mrb[0].mxu0 %v1261
        %v1454 = vpop.f32.mrb[0].mxu0
        %v1455 = vadd.f32 %v1290, %v1454
        %v1456 = vpop.f32.mrb[0].mxu0
        %v1457 = vpop.f32.mrb[0].mxu0
        %v1458 = vadd.f32 %v1290, %v1457
        %v1459 = vpop.f32.mrb[0].mxu0
        %1460 = vmatprep.mubr.bf16.mxu0 0
        %1461 = vmatmul.mubr.bf16.gmra.mrb[0].mxu0 %v1262
        %v1462 = vpop.f32.mrb[0].mxu0
        %v1463 = vadd.f32 %v1290, %v1462
        %v1464 = vpop.f32.mrb[0].mxu0
        %v1465 = vpop.f32.mrb[0].mxu0
        %v1466 = vadd.f32 %v1290, %v1465
        %v1467 = vpop.f32.mrb[0].mxu0
        %1468 = vmatprep.mubr.bf16.mxu0 0
        %1469 = vmatmul.mubr.bf16.gmra.mrb[0].mxu0 %v1263
        %v1470 = vpop.f32.mrb[0].mxu0
        %v1471 = vadd.f32 %v1290, %v1470
        %v1472 = vpop.f32.mrb[0].mxu0
        %v1473 = vpop.f32.mrb[0].mxu0
        %v1474 = vadd.f32 %v1290, %v1473
        %v1475 = vpop.f32.mrb[0].mxu0
        %1476 = vmatprep.mubr.bf16.mxu0 0
        %1477 = vmatmul.mubr.bf16.gmra.mrb[0].mxu0 %v1264
        %v1478 = vpop.f32.mrb[0].mxu0
        %v1479 = vadd.f32 %v1290, %v1478
        %v1480 = vpop.f32.mrb[0].mxu0
        %v1481 = vpop.f32.mrb[0].mxu0
        %v1482 = vadd.f32 %v1290, %v1481
        %v1483 = vpop.f32.mrb[0].mxu0
        %1484 = vmatprep.mubr.bf16.mxu0 0
        %1485 = vmatmul.mubr.bf16.gmra.mrb[0].mxu0 %v1265
        %v1486 = vpop.f32.mrb[0].mxu0
        %v1487 = vadd.f32 %v1290, %v1486
        %v1488 = vpop.f32.mrb[0].mxu0
        %v1489 = vpop.f32.mrb[0].mxu0
        %v1490 = vadd.f32 %v1290, %v1489
        %v1491 = vpop.f32.mrb[0].mxu0
        %1492 = vmatprep.mubr.bf16.mxu0 0
        %1493 = vmatmul.mubr.bf16.gmra.mrb[0].mxu0 %v1266
        %v1494 = vpop.f32.mrb[0].mxu0
        %v1495 = vadd.f32 %v1290, %v1494
        %v1496 = vpop.f32.mrb[0].mxu0
        %v1497 = vpop.f32.mrb[0].mxu0
        %v1498 = vadd.f32 %v1290, %v1497
        %v1499 = vpop.f32.mrb[0].mxu0
        %1500 = vdwg.mxu0
        %v1501 = vunpack.c.l.bf16 %v1235
        %v1502 = vunpack.c.h.bf16 %v1235
        %v1503 = vunpack.c.l.bf16 %v1236
        %v1504 = vunpack.c.h.bf16 %v1236
        %v1505 = vunpack.c.l.bf16 %v1237
        %v1506 = vunpack.c.h.bf16 %v1237
        %v1507 = vunpack.c.l.bf16 %v1238
        %v1508 = vunpack.c.h.bf16 %v1238
        %v1509 = vunpack.c.l.bf16 %v1239
        %v1510 = vunpack.c.h.bf16 %v1239
        %v1511 = vunpack.c.l.bf16 %v1240
        %v1512 = vunpack.c.h.bf16 %v1240
        %v1513 = vunpack.c.l.bf16 %v1241
        %v1514 = vunpack.c.h.bf16 %v1241
        %v1515 = vunpack.c.l.bf16 %v1242
        %v1516 = vunpack.c.h.bf16 %v1242
        %v1517 = vunpack.c.l.bf16 %v1243
        %v1518 = vunpack.c.h.bf16 %v1243
        %v1519 = vunpack.c.l.bf16 %v1244
        %v1520 = vunpack.c.h.bf16 %v1244
        %v1521 = vunpack.c.l.bf16 %v1245
        %v1522 = vunpack.c.h.bf16 %v1245
        %v1523 = vunpack.c.l.bf16 %v1246
        %v1524 = vunpack.c.h.bf16 %v1246
        %v1525 = vunpack.c.l.bf16 %v1247
        %v1526 = vunpack.c.h.bf16 %v1247
        %v1527 = vunpack.c.l.bf16 %v1248
        %v1528 = vunpack.c.h.bf16 %v1248
        %v1529 = vunpack.c.l.bf16 %v1249
        %v1530 = vunpack.c.h.bf16 %v1249
        %v1531 = vunpack.c.l.bf16 %v1250
        %v1532 = vunpack.c.h.bf16 %v1250
        %v1533 = vadd.f32 %v1375, %v1501
        %v1534 = vadd.f32 %v1378, %v1502
        %v1535 = vadd.f32 %v1383, %v1503
        %v1536 = vadd.f32 %v1386, %v1504
        %v1537 = vadd.f32 %v1391, %v1505
        %v1538 = vadd.f32 %v1394, %v1506
        %v1539 = vadd.f32 %v1399, %v1507
        %v1540 = vadd.f32 %v1402, %v1508
        %v1541 = vadd.f32 %v1407, %v1509
        %v1542 = vadd.f32 %v1410, %v1510
        %v1543 = vadd.f32 %v1415, %v1511
        %v1544 = vadd.f32 %v1418, %v1512
        %v1545 = vadd.f32 %v1423, %v1513
        %v1546 = vadd.f32 %v1426, %v1514
        %v1547 = vadd.f32 %v1431, %v1515
        %v1548 = vadd.f32 %v1434, %v1516
        %v1549 = vadd.f32 %v1439, %v1517
        %v1550 = vadd.f32 %v1442, %v1518
        %v1551 = vadd.f32 %v1447, %v1519
        %v1552 = vadd.f32 %v1450, %v1520
        %v1553 = vadd.f32 %v1455, %v1521
        %v1554 = vadd.f32 %v1458, %v1522
        %v1555 = vadd.f32 %v1463, %v1523
        %v1556 = vadd.f32 %v1466, %v1524
        %v1557 = vadd.f32 %v1471, %v1525
        %v1558 = vadd.f32 %v1474, %v1526
        %v1559 = vadd.f32 %v1479, %v1527
        %v1560 = vadd.f32 %v1482, %v1528
        %v1561 = vadd.f32 %v1487, %v1529
        %v1562 = vadd.f32 %v1490, %v1530
        %v1563 = vadd.f32 %v1495, %v1531
        %v1564 = vadd.f32 %v1498, %v1532
        %v1565 = vpack.c.bf16 %v1534, %v1533
        %v1566 = vpack.c.bf16 %v1536, %v1535
        %v1567 = vpack.c.bf16 %v1538, %v1537
        %v1568 = vpack.c.bf16 %v1540, %v1539
        %v1569 = vpack.c.bf16 %v1542, %v1541
        %v1570 = vpack.c.bf16 %v1544, %v1543
        %v1571 = vpack.c.bf16 %v1546, %v1545
        %v1572 = vpack.c.bf16 %v1548, %v1547
        %v1573 = vpack.c.bf16 %v1550, %v1549
        %v1574 = vpack.c.bf16 %v1552, %v1551
        %v1575 = vpack.c.bf16 %v1554, %v1553
        %v1576 = vpack.c.bf16 %v1556, %v1555
        %v1577 = vpack.c.bf16 %v1558, %v1557
        %v1578 = vpack.c.bf16 %v1560, %v1559
        %v1579 = vpack.c.bf16 %v1562, %v1561
        %v1580 = vpack.c.bf16 %v1564, %v1563
        %vm1581 = vcmp.ge.bf16.partialorder %v1565, 0
        %vm1582 = vcmp.ge.bf16.partialorder %v1566, 0
        %vm1583 = vcmp.ge.bf16.partialorder %v1567, 0
        %vm1584 = vcmp.ge.bf16.partialorder %v1568, 0
        %vm1585 = vcmp.ge.bf16.partialorder %v1569, 0
        %vm1586 = vcmp.ge.bf16.partialorder %v1570, 0
        %vm1587 = vcmp.ge.bf16.partialorder %v1571, 0
        %vm1588 = vcmp.ge.bf16.partialorder %v1572, 0
        %vm1589 = vcmp.ge.bf16.partialorder %v1573, 0
        %vm1590 = vcmp.ge.bf16.partialorder %v1574, 0
        %vm1591 = vcmp.ge.bf16.partialorder %v1575, 0
        %vm1592 = vcmp.ge.bf16.partialorder %v1576, 0
        %vm1593 = vcmp.ge.bf16.partialorder %v1577, 0
        %vm1594 = vcmp.ge.bf16.partialorder %v1578, 0
        %vm1595 = vcmp.ge.bf16.partialorder %v1579, 0
        %vm1596 = vcmp.ge.bf16.partialorder %v1580, 0
        %v1597 = vmul.bf16 %v841, %v1565
        %v1598 = vmul.bf16 %v841, %v1566
        %v1599 = vmul.bf16 %v841, %v1567
        %v1600 = vmul.bf16 %v841, %v1568
        %v1601 = vmul.bf16 %v841, %v1569
        %v1602 = vmul.bf16 %v841, %v1570
        %v1603 = vmul.bf16 %v841, %v1571
        %v1604 = vmul.bf16 %v841, %v1572
        %v1605 = vmul.bf16 %v841, %v1573
        %v1606 = vmul.bf16 %v841, %v1574
        %v1607 = vmul.bf16 %v841, %v1575
        %v1608 = vmul.bf16 %v841, %v1576
        %v1609 = vmul.bf16 %v841, %v1577
        %v1610 = vmul.bf16 %v841, %v1578
        %v1611 = vmul.bf16 %v841, %v1579
        %v1612 = vmul.bf16 %v841, %v1580
        %v1613 = vsel %vm1581, %v1565, %v1597
        %v1614 = vsel %vm1582, %v1566, %v1598
        %v1615 = vsel %vm1583, %v1567, %v1599
        %v1616 = vsel %vm1584, %v1568, %v1600
        %v1617 = vsel %vm1585, %v1569, %v1601
        %v1618 = vsel %vm1586, %v1570, %v1602
        %v1619 = vsel %vm1587, %v1571, %v1603
        %v1620 = vsel %vm1588, %v1572, %v1604
        %v1621 = vsel %vm1589, %v1573, %v1605
        %v1622 = vsel %vm1590, %v1574, %v1606
        %v1623 = vsel %vm1591, %v1575, %v1607
        %v1624 = vsel %vm1592, %v1576, %v1608
        %v1625 = vsel %vm1593, %v1577, %v1609
        %v1626 = vsel %vm1594, %v1578, %v1610
        %v1627 = vsel %vm1595, %v1579, %v1611
        %v1628 = vsel %vm1596, %v1580, %v1612
        %v1629 = vld [vmem:[#allocation9] sm:$0xf]
        %v1630 = vld [vmem:[#allocation9 + $0x4] sm:$0xf]
        %v1631 = vld [vmem:[#allocation9 + $0x8] sm:$0xf]
        %v1632 = vld [vmem:[#allocation9 + $0xc] sm:$0xf]
        %v1633 = vld [vmem:[#allocation9 + $0x10] sm:$0xf]
        %v1634 = vld [vmem:[#allocation9 + $0x14] sm:$0xf]
        %v1635 = vld [vmem:[#allocation9 + $0x18] sm:$0xf]
        %v1636 = vld [vmem:[#allocation9 + $0x1c] sm:$0xf]
        %v1637 = vld [vmem:[#allocation9 + $0x20] sm:$0xf]
        %v1638 = vld [vmem:[#allocation9 + $0x24] sm:$0xf]
        %v1639 = vld [vmem:[#allocation9 + $0x28] sm:$0xf]
        %v1640 = vld [vmem:[#allocation9 + $0x2c] sm:$0xf]
        %v1641 = vld [vmem:[#allocation9 + $0x30] sm:$0xf]
        %v1642 = vld [vmem:[#allocation9 + $0x34] sm:$0xf]
        %v1643 = vld [vmem:[#allocation9 + $0x38] sm:$0xf]
        %v1644 = vld [vmem:[#allocation9 + $0x3c] sm:$0xf]
        %v1645 = vld [vmem:[%s6] sm:$0x1]
        %v1647 = vlaneseq
        %v1648 = vshrl.u32 %v1647, 7
        %v1649 = vsub.s32 0, %v1648
        %v1650 = vrot.slane %v1645, %v1649
        %v1668 = vunpack.c.l.b16 %v1629
        %v1669 = vunpack.c.l.b16 %v1630
        %v1670 = vunpack.c.l.b16 %v1631
        %v1671 = vunpack.c.l.b16 %v1632
        %v1672 = vunpack.c.l.b16 %v1633
        %v1673 = vunpack.c.l.b16 %v1634
        %v1674 = vunpack.c.l.b16 %v1635
        %v1675 = vunpack.c.l.b16 %v1636
        %v1676 = vunpack.c.l.b16 %v1637
        %v1677 = vunpack.c.l.b16 %v1638
        %v1678 = vunpack.c.l.b16 %v1639
        %v1679 = vunpack.c.l.b16 %v1640
        %v1680 = vunpack.c.l.b16 %v1641
        %v1681 = vunpack.c.l.b16 %v1642
        %v1682 = vunpack.c.l.b16 %v1643
        %v1683 = vunpack.c.l.b16 %v1644
        %v1684 = vpack.c.b16 %v1669, %v1668
        %v1685 = vpack.c.b16 %v1671, %v1670
        %v1686 = vpack.c.b16 %v1673, %v1672
        %v1687 = vpack.c.b16 %v1675, %v1674
        %v1688 = vpack.c.b16 %v1677, %v1676
        %v1689 = vpack.c.b16 %v1679, %v1678
        %v1690 = vpack.c.b16 %v1681, %v1680
        %v1691 = vpack.c.b16 %v1683, %v1682
        %1700 = vmatprep.subr.bf16.mxu0 0
        %1701 = vmatpush1.bf16.msra.mxu0 %v1684
        %1702 = vmatprep.subr.bf16.mxu0 0
        %1703 = vmatpush1.bf16.msra.mxu0 %v1685
        %1704 = vmatprep.subr.bf16.mxu0 0
        %1705 = vmatpush1.bf16.msra.mxu0 %v1686
        %1706 = vmatprep.subr.bf16.mxu0 0
        %1707 = vmatpush1.bf16.msra.mxu0 %v1687
        %1708 = vmatprep.subr.bf16.mxu0 0
        %1709 = vmatpush1.bf16.msra.mxu0 %v1688
        %1710 = vmatprep.subr.bf16.mxu0 0
        %1711 = vmatpush1.bf16.msra.mxu0 %v1689
        %1712 = vmatprep.subr.bf16.mxu0 0
        %1713 = vmatpush1.bf16.msra.mxu0 %v1690
        %1714 = vmatprep.subr.bf16.mxu0 0
        %1715 = vmatpush1.bf16.msra.mxu0 %v1691
        %1716 = vmatprep.subr.bf16.mxu0 0
        %1717 = vmatpush1.bf16.msra.mxu0 0
        %1718 = vmatprep.subr.bf16.mxu0 0
        %1719 = vmatpush1.bf16.msra.mxu0 0
        %1720 = vmatprep.subr.bf16.mxu0 0
        %1721 = vmatpush1.bf16.msra.mxu0 0
        %1722 = vmatprep.subr.bf16.mxu0 0
        %1723 = vmatpush1.bf16.msra.mxu0 0
        %1724 = vmatprep.subr.bf16.mxu0 0
        %1725 = vmatpush1.bf16.msra.mxu0 0
        %1726 = vmatprep.subr.bf16.mxu0 0
        %1727 = vmatpush1.bf16.msra.mxu0 0
        %1728 = vmatprep.subr.bf16.mxu0 0
        %1729 = vmatpush1.bf16.msra.mxu0 0
        %1730 = vmatprep.subr.bf16.mxu0 0
        %1731 = vmatpush1.bf16.msra.mxu0 0
        %1732 = vmatprep.mubr.bf16.mxu0 0
        %1733 = vmatmul.mubr.bf16.gmra.mrb[0].mxu0 %v1613
        %v1734 = vpop.f32.mrb[0].mxu0
        %v1735 = vadd.f32 %v1650, %v1734
        %v1736 = vpop.f32.mrb[0].mxu0
        %v1737 = vpop.f32.mrb[0].mxu0
        %v1738 = vadd.f32 %v1650, %v1737
        %v1739 = vpop.f32.mrb[0].mxu0
        %1740 = vmatprep.mubr.bf16.mxu0 0
        %1741 = vmatmul.mubr.bf16.gmra.mrb[0].mxu0 %v1614
        %v1742 = vpop.f32.mrb[0].mxu0
        %v1743 = vadd.f32 %v1650, %v1742
        %v1744 = vpop.f32.mrb[0].mxu0
        %v1745 = vpop.f32.mrb[0].mxu0
        %v1746 = vadd.f32 %v1650, %v1745
        %v1747 = vpop.f32.mrb[0].mxu0
        %1748 = vmatprep.mubr.bf16.mxu0 0
        %1749 = vmatmul.mubr.bf16.gmra.mrb[0].mxu0 %v1615
        %v1750 = vpop.f32.mrb[0].mxu0
        %v1751 = vadd.f32 %v1650, %v1750
        %v1752 = vpop.f32.mrb[0].mxu0
        %v1753 = vpop.f32.mrb[0].mxu0
        %v1754 = vadd.f32 %v1650, %v1753
        %v1755 = vpop.f32.mrb[0].mxu0
        %1756 = vmatprep.mubr.bf16.mxu0 0
        %1757 = vmatmul.mubr.bf16.gmra.mrb[0].mxu0 %v1616
        %v1758 = vpop.f32.mrb[0].mxu0
        %v1759 = vadd.f32 %v1650, %v1758
        %v1760 = vpop.f32.mrb[0].mxu0
        %v1761 = vpop.f32.mrb[0].mxu0
        %v1762 = vadd.f32 %v1650, %v1761
        %v1763 = vpop.f32.mrb[0].mxu0
        %1764 = vmatprep.mubr.bf16.mxu0 0
        %1765 = vmatmul.mubr.bf16.gmra.mrb[0].mxu0 %v1617
        %v1766 = vpop.f32.mrb[0].mxu0
        %v1767 = vadd.f32 %v1650, %v1766
        %v1768 = vpop.f32.mrb[0].mxu0
        %v1769 = vpop.f32.mrb[0].mxu0
        %v1770 = vadd.f32 %v1650, %v1769
        %v1771 = vpop.f32.mrb[0].mxu0
        %1772 = vmatprep.mubr.bf16.mxu0 0
        %1773 = vmatmul.mubr.bf16.gmra.mrb[0].mxu0 %v1618
        %v1774 = vpop.f32.mrb[0].mxu0
        %v1775 = vadd.f32 %v1650, %v1774
        %v1776 = vpop.f32.mrb[0].mxu0
        %v1777 = vpop.f32.mrb[0].mxu0
        %v1778 = vadd.f32 %v1650, %v1777
        %v1779 = vpop.f32.mrb[0].mxu0
        %1780 = vmatprep.mubr.bf16.mxu0 0
        %1781 = vmatmul.mubr.bf16.gmra.mrb[0].mxu0 %v1619
        %v1782 = vpop.f32.mrb[0].mxu0
        %v1783 = vadd.f32 %v1650, %v1782
        %v1784 = vpop.f32.mrb[0].mxu0
        %v1785 = vpop.f32.mrb[0].mxu0
        %v1786 = vadd.f32 %v1650, %v1785
        %v1787 = vpop.f32.mrb[0].mxu0
        %1788 = vmatprep.mubr.bf16.mxu0 0
        %1789 = vmatmul.mubr.bf16.gmra.mrb[0].mxu0 %v1620
        %v1790 = vpop.f32.mrb[0].mxu0
        %v1791 = vadd.f32 %v1650, %v1790
        %v1792 = vpop.f32.mrb[0].mxu0
        %v1793 = vpop.f32.mrb[0].mxu0
        %v1794 = vadd.f32 %v1650, %v1793
        %v1795 = vpop.f32.mrb[0].mxu0
        %1796 = vmatprep.mubr.bf16.mxu0 0
        %1797 = vmatmul.mubr.bf16.gmra.mrb[0].mxu0 %v1621
        %v1798 = vpop.f32.mrb[0].mxu0
        %v1799 = vadd.f32 %v1650, %v1798
        %v1800 = vpop.f32.mrb[0].mxu0
        %v1801 = vpop.f32.mrb[0].mxu0
        %v1802 = vadd.f32 %v1650, %v1801
        %v1803 = vpop.f32.mrb[0].mxu0
        %1804 = vmatprep.mubr.bf16.mxu0 0
        %1805 = vmatmul.mubr.bf16.gmra.mrb[0].mxu0 %v1622
        %v1806 = vpop.f32.mrb[0].mxu0
        %v1807 = vadd.f32 %v1650, %v1806
        %v1808 = vpop.f32.mrb[0].mxu0
        %v1809 = vpop.f32.mrb[0].mxu0
        %v1810 = vadd.f32 %v1650, %v1809
        %v1811 = vpop.f32.mrb[0].mxu0
        %1812 = vmatprep.mubr.bf16.mxu0 0
        %1813 = vmatmul.mubr.bf16.gmra.mrb[0].mxu0 %v1623
        %v1814 = vpop.f32.mrb[0].mxu0
        %v1815 = vadd.f32 %v1650, %v1814
        %v1816 = vpop.f32.mrb[0].mxu0
        %v1817 = vpop.f32.mrb[0].mxu0
        %v1818 = vadd.f32 %v1650, %v1817
        %v1819 = vpop.f32.mrb[0].mxu0
        %1820 = vmatprep.mubr.bf16.mxu0 0
        %1821 = vmatmul.mubr.bf16.gmra.mrb[0].mxu0 %v1624
        %v1822 = vpop.f32.mrb[0].mxu0
        %v1823 = vadd.f32 %v1650, %v1822
        %v1824 = vpop.f32.mrb[0].mxu0
        %v1825 = vpop.f32.mrb[0].mxu0
        %v1826 = vadd.f32 %v1650, %v1825
        %v1827 = vpop.f32.mrb[0].mxu0
        %1828 = vmatprep.mubr.bf16.mxu0 0
        %1829 = vmatmul.mubr.bf16.gmra.mrb[0].mxu0 %v1625
        %v1830 = vpop.f32.mrb[0].mxu0
        %v1831 = vadd.f32 %v1650, %v1830
        %v1832 = vpop.f32.mrb[0].mxu0
        %v1833 = vpop.f32.mrb[0].mxu0
        %v1834 = vadd.f32 %v1650, %v1833
        %v1835 = vpop.f32.mrb[0].mxu0
        %1836 = vmatprep.mubr.bf16.mxu0 0
        %1837 = vmatmul.mubr.bf16.gmra.mrb[0].mxu0 %v1626
        %v1838 = vpop.f32.mrb[0].mxu0
        %v1839 = vadd.f32 %v1650, %v1838
        %v1840 = vpop.f32.mrb[0].mxu0
        %v1841 = vpop.f32.mrb[0].mxu0
        %v1842 = vadd.f32 %v1650, %v1841
        %v1843 = vpop.f32.mrb[0].mxu0
        %1844 = vmatprep.mubr.bf16.mxu0 0
        %1845 = vmatmul.mubr.bf16.gmra.mrb[0].mxu0 %v1627
        %v1846 = vpop.f32.mrb[0].mxu0
        %v1847 = vadd.f32 %v1650, %v1846
        %v1848 = vpop.f32.mrb[0].mxu0
        %v1849 = vpop.f32.mrb[0].mxu0
        %v1850 = vadd.f32 %v1650, %v1849
        %v1851 = vpop.f32.mrb[0].mxu0
        %1852 = vmatprep.mubr.bf16.mxu0 0
        %1853 = vmatmul.mubr.bf16.gmra.mrb[0].mxu0 %v1628
        %v1854 = vpop.f32.mrb[0].mxu0
        %v1855 = vadd.f32 %v1650, %v1854
        %v1856 = vpop.f32.mrb[0].mxu0
        %v1857 = vpop.f32.mrb[0].mxu0
        %v1858 = vadd.f32 %v1650, %v1857
        %v1859 = vpop.f32.mrb[0].mxu0
        %1860 = vdwg.mxu0
        %1861 = vst [vmem:[%s368] sm:$0xff] %v1735
        %1862 = vst [vmem:[%s368 + $0x8] sm:$0xff] %v1738
        %1863 = vst [vmem:[%s368 + $0x10] sm:$0xff] %v1743
        %1864 = vst [vmem:[%s368 + $0x18] sm:$0xff] %v1746
        %1865 = vst [vmem:[%s368 + $0x20] sm:$0xff] %v1751
        %1866 = vst [vmem:[%s368 + $0x28] sm:$0xff] %v1754
        %1867 = vst [vmem:[%s368 + $0x30] sm:$0xff] %v1759
        %1868 = vst [vmem:[%s368 + $0x38] sm:$0xff] %v1762
        %1869 = vst [vmem:[%s368 + $0x40] sm:$0xff] %v1767
        %1870 = vst [vmem:[%s368 + $0x48] sm:$0xff] %v1770
        %1871 = vst [vmem:[%s368 + $0x50] sm:$0xff] %v1775
        %1872 = vst [vmem:[%s368 + $0x58] sm:$0xff] %v1778
        %1873 = vst [vmem:[%s368 + $0x60] sm:$0xff] %v1783
        %1874 = vst [vmem:[%s368 + $0x68] sm:$0xff] %v1786
        %1875 = vst [vmem:[%s368 + $0x70] sm:$0xff] %v1791
        %1876 = vst [vmem:[%s368 + $0x78] sm:$0xff] %v1794
        %1877 = vst [vmem:[%s368 + $0x80] sm:$0xff] %v1799
        %1878 = vst [vmem:[%s368 + $0x88] sm:$0xff] %v1802
        %1879 = vst [vmem:[%s368 + $0x90] sm:$0xff] %v1807
        %1880 = vst [vmem:[%s368 + $0x98] sm:$0xff] %v1810
        %1881 = vst [vmem:[%s368 + $0xa0] sm:$0xff] %v1815
        %1882 = vst [vmem:[%s368 + $0xa8] sm:$0xff] %v1818
        %1883 = vst [vmem:[%s368 + $0xb0] sm:$0xff] %v1823
        %1884 = vst [vmem:[%s368 + $0xb8] sm:$0xff] %v1826
        %1885 = vst [vmem:[%s368 + $0xc0] sm:$0xff] %v1831
        %1886 = vst [vmem:[%s368 + $0xc8] sm:$0xff] %v1834
        %1887 = vst [vmem:[%s368 + $0xd0] sm:$0xff] %v1839
        %1888 = vst [vmem:[%s368 + $0xd8] sm:$0xff] %v1842
        %1889 = vst [vmem:[%s368 + $0xe0] sm:$0xff] %v1847
        %1890 = vst [vmem:[%s368 + $0xe8] sm:$0xff] %v1850
        %1891 = vst [vmem:[%s368 + $0xf0] sm:$0xff] %v1855
        %1892 = vst [vmem:[%s368 + $0xf8] sm:$0xff] %v1858
        %s1893 = sand.u32 %s209, 1
        %s1894 = scalar_lea.sflag [#allocation5], %s1893
        %s1895 = sand.u32 %s209, 1
        %s1896 = smul.addr %s1895, 256
        %s1897 = scalar_lea.vmem [#allocation11], %s1896
        // Predicated region
        $region69: #{tpu_custom_call.1} parent=51 // pred_check
          %p1898 = pneg %p219
        $region70: #{tpu_custom_call.1} parent=51 // pred_check_branch
          %1900 = sbr.rel (%p1898) target = $region72
        $region71: #{tpu_custom_call.1} parent=51 // pred_region
          %s1901 = smul.u32 32, %s28
          %s1903 = ssub.s32 4096, 4096
          %1904 = vsyncadd %s1894, %s1903
          %s1905 = smul.addr %s1901, 128
          %s1906 = scalar_lea.hbm %s8, %s1905
          %s1907 = sshll.u32 %s1897, 4
          %s1908 = int_to_ptr.vmem [resolvable:$true] %s1907
          %1913 = dma.vmem_to_hbm [thread:$0]  %s1908, 4096, %s1906, %s1894, 128, 128, 8
        $region72: #{tpu_custom_call.1} parent=51 // pred_fallthru
          _
      $region52: #{tpu_custom_call.1} parent=5 // pred_fallthru
        _
      %p1914 = scmp.le.s32.totalorder 2, %s23
      // Predicated region
      $region73: #{tpu_custom_call.1} parent=5 // pred_check
        %p1915 = pneg %p1914
      $region74: #{tpu_custom_call.1} parent=5 // pred_check_branch
        %1917 = sbr.rel (%p1915) target = $region76
      $region75: #{tpu_custom_call.1} parent=5 // pred_region
        %s1918 = ssub.s32 %s23, 2
        // Predicated region
        $region77: #{tpu_custom_call.1} parent=75 // pred_check
          %p1919 = pneg %p225
        $region78: #{tpu_custom_call.1} parent=75 // pred_check_branch
          %1921 = sbr.rel (%p1919) target = $region80
        $region79: #{tpu_custom_call.1} parent=75 // pred_region
          %s1922 = sand.u32 %s210, 1
          %s1923 = scalar_lea.sflag [#allocation5], %s1922
          %s1924 = sand.u32 %s210, 1
          %s1925 = smul.addr %s1924, 256
          %s1926 = scalar_lea.vmem [#allocation11], %s1925
          %1927 = dma.done %s1923, 4096
        $region80: #{tpu_custom_call.1} parent=75 // pred_fallthru
          _
      $region76: #{tpu_custom_call.1} parent=5 // pred_fallthru
        _
    $region6: #{tpu_custom_call.1} parent=1 // loop_footer
      %s27 = sadd.s32 1, %s23
    $region7: #{tpu_custom_call.1} parent=1 // loop_footer_branch
      %22 = sbr.rel target = $region3
    $region8: #{tpu_custom_call.1} parent=1 // loop_exit
      _
    %1928 = vsyncpa [#allocation4], 1
    %s1929 = scalar_lea.sflag [#allocation4], 1
    %1930 = vsyncpa %s1929, 1
    %1931 = vsyncpa [#allocation7], 1
    %1932 = vsyncpa [#allocation10], 1
    %1933 = vsyncpa [#allocation5], 1
    %s1934 = scalar_lea.sflag [#allocation5], 1
    %1935 = vsyncpa %s1934, 1

</llo_original>
